<compile_context>
chip_gen: v7x
topology: tpu7x:2x2x1
jax: 0.10.0
libtpu: 0.0.40
codegen_flags: <defaults>
</compile_context>

<pallas_src>
import functools

import jax
import jax.numpy as jnp
from jax.experimental import pallas as pl
from jax.experimental.pallas import tpu as pltpu

BN_EPS = 1e-5  # torch.nn.BatchNorm2d default


# ---------------------------------------------------------------------------
# Fused kernel: one (batch, row-tile) step
# ---------------------------------------------------------------------------

def _bottleneck_kernel(x_ref, xt_ref, xb_ref, mL_ref, mR_ref,
                       w1_ref, b1_ref, w2_ref, b2_ref, w3_ref, b3_ref,
                       o_ref, *, W, TH):
    """Fused conv1+bn1+relu -> conv2(3x3)+bn2+relu -> conv3+bn3 + residual + relu.

    x_ref : (TH*W, Cin)   rows of this tile (also the residual)
    xt_ref: (W, Cin)      halo row above the tile (clamped; zeroed on first tile)
    xb_ref: (W, Cin)      halo row below the tile (clamped; zeroed on last tile)
    mL/mR : ((TH+2)*W, 1) lane-column validity masks for dx = -1 / +1
    w1    : (Cin, P)   b1: (1, P)        -- BN1 folded
    w2    : (9*P, P)   b2: (1, P)        -- BN2 folded, rows ordered (kh, kw, cin)
    w3    : (P, Cout)  b3: (1, Cout)     -- BN3 folded
    o_ref : (TH*W, Cout)
    """
    f32 = jnp.float32
    t = pl.program_id(1)
    n_t = pl.num_programs(1)
    THW = TH * W
    E = (TH + 2) * W

    x = x_ref[...].astype(f32)
    w1 = w1_ref[...]
    b1 = b1_ref[...]

    def stage_a(v):  # conv1 (1x1) + bn1 + relu
        return jnp.maximum(
            jnp.dot(v.astype(f32), w1, preferred_element_type=f32) + b1, 0.0)

    y1 = stage_a(x)                                                # (THW, P)
    # halo rows of y1; zeroed when outside the image (== conv2's zero padding)
    y1_top = stage_a(xt_ref[...]) * (t > 0).astype(f32)            # (W, P)
    y1_bot = stage_a(xb_ref[...]) * (t < n_t - 1).astype(f32)      # (W, P)

    ext = jnp.concatenate([y1_top, y1, y1_bot], axis=0)            # (E, P)

    # dx = -1 / +1 shifted copies, masked at the left/right image columns.
    sh_m1 = pltpu.roll(ext, shift=1, axis=0) * mL_ref[...]         # sh_m1[j] = ext[j-1]
    sh_p1 = pltpu.roll(ext, shift=E - 1, axis=0) * mR_ref[...]     # sh_p1[j] = ext[j+1]

    ext3 = jnp.concatenate([sh_m1, ext, sh_p1], axis=1)            # (E, 3P): (dx, cin)

    # deep-K im2col: dy = -1,0,+1 are static row slices thanks to the halo rows.
    x2 = jnp.concatenate(
        [ext3[0:THW, :], ext3[W:W + THW, :], ext3[2 * W:2 * W + THW, :]],
        axis=1)                                                    # (THW, 9P): (kh,kw,cin)

    # conv2 (3x3) + bn2 + relu as ONE K = 9*P matmul.
    y2 = jnp.maximum(
        jnp.dot(x2, w2_ref[...], preferred_element_type=f32) + b2_ref[...], 0.0)

    # conv3 (1x1) + bn3 + residual + relu.
    y3 = jnp.dot(y2, w3_ref[...], preferred_element_type=f32) + b3_ref[...]
    o_ref[...] = jnp.maximum(y3 + x, 0.0).astype(o_ref.dtype)


# ---------------------------------------------------------------------------
# Wrapper
# ---------------------------------------------------------------------------

def _fold_bn(w, gamma, beta, mean, var):
    """Fold eval-mode BN into the preceding (bias-free) conv: returns (w', bias')."""
    scale = (gamma * jax.lax.rsqrt(var + BN_EPS)).astype(jnp.float32)
    return (w.astype(jnp.float32) * scale,
            (beta - mean * scale).astype(jnp.float32))


def _pick_tile_rows(H, W, requested):
    """Largest divisor of H that is <= the requested tile height."""
    if requested is None:
        requested = max(1, 1024 // max(W, 1))   # aim for ~1024 output rows per tile
    requested = max(1, min(requested, H))
    th = 1
    for d in range(1, requested + 1):
        if H % d == 0:
            th = d
    return th


def bottleneck_forward(x_nchw, w1, w2, w3, bn1, bn2, bn3, *, tile_rows=None):
    """Bottleneck.forward (stride=1, downsample=None), NCHW in/out like torch.

    x_nchw: (B, inplanes, H, W); w1: (1,1,inplanes,planes); w2: (3,3,planes,planes);
    w3: (1,1,planes,inplanes); bn*: (gamma, beta, running_mean, running_var).

    Per-step VMEM ~ a few * TH*W * max(Cin, 9*planes) f32; default TH keeps this well
    under the scoped VMEM defaults on v5e/v6e/v7x.  Raise tile_rows (and, if needed,
    vmem_limit_bytes via pltpu.CompilerParams) for very wide images.
    """
    B, Cin, H, W = x_nchw.shape
    P = w1.shape[-1]
    Cout = w3.shape[-1]
    assert Cin == Cout, "identity residual path requires inplanes == planes * expansion"
    assert W % 8 == 0, "W must be a multiple of 8 for the flattened-row layout"

    TH = _pick_tile_rows(H, W, tile_rows)
    n_t = H // TH
    THW = TH * W
    E = (TH + 2) * W

    # Fold BN into the convs (done once, outside the kernel).
    w1f, b1f = _fold_bn(w1.reshape(Cin, P), *bn1)        # (Cin, P), (P,)
    w2f, b2f = _fold_bn(w2, *bn2)                        # (3,3,P,P) scaled over cout
    w2d = w2f.reshape(9 * P, P)                          # rows ordered (kh, kw, cin)
    w3f, b3f = _fold_bn(w3.reshape(P, Cout), *bn3)       # (P, Cout), (Cout,)

    # Column-boundary masks for dx = -1 / +1 (grid-invariant, built once).
    col = jnp.arange(E, dtype=jnp.int32) % W
    mL = (col != 0).astype(jnp.float32).reshape(E, 1)
    mR = (col != W - 1).astype(jnp.float32).reshape(E, 1)

    # NHWC flattened per image.  TODO(synk): transposes go away if the surrounding
    # model supplies/consumes NHWC directly.
    xf = jnp.transpose(x_nchw, (0, 2, 3, 1)).reshape(B, H * W, Cin)

    kernel = functools.partial(_bottleneck_kernel, W=W, TH=TH)

    out = pl.pallas_call(
        kernel,
        out_shape=jax.ShapeDtypeStruct((B, H * W, Cout), x_nchw.dtype),
        grid_spec=pltpu.PrefetchScalarGridSpec(
            num_scalar_prefetch=0,
            grid=(B, n_t),
            in_specs=[
                # main rows of this tile (also the residual)
                pl.BlockSpec((None, THW, Cin), lambda b, t: (b, t, 0)),
                # 1-row halos: block size = one row, so block index == row index
                pl.BlockSpec((None, W, Cin),
                             lambda b, t: (b, jnp.maximum(t * TH - 1, 0), 0)),
                pl.BlockSpec((None, W, Cin),
                             lambda b, t: (b, jnp.minimum(t * TH + TH, H - 1), 0)),
                # grid-invariant masks / folded weights & biases
                pl.BlockSpec((E, 1), lambda b, t: (0, 0)),
                pl.BlockSpec((E, 1), lambda b, t: (0, 0)),
                pl.BlockSpec((Cin, P), lambda b, t: (0, 0)),
                pl.BlockSpec((1, P), lambda b, t: (0, 0)),
                pl.BlockSpec((9 * P, P), lambda b, t: (0, 0)),
                pl.BlockSpec((1, P), lambda b, t: (0, 0)),
                pl.BlockSpec((P, Cout), lambda b, t: (0, 0)),
                pl.BlockSpec((1, Cout), lambda b, t: (0, 0)),
            ],
            out_specs=pl.BlockSpec((None, THW, Cout), lambda b, t: (b, t, 0)),
        ),
        compiler_params=pltpu.CompilerParams(
            dimension_semantics=("parallel", "parallel")),
    )(xf, xf, xf, mL, mR,
      w1f, b1f.reshape(1, P), w2d, b2f.reshape(1, P), w3f, b3f.reshape(1, Cout))

    return jnp.transpose(out.reshape(B, H, W, Cout), (0, 3, 1, 2))


# ---------------------------------------------------------------------------
# Pure-JAX reference (unfolded conv/BN) for correctness check
# ---------------------------------------------------------------------------

def _reference_forward(x_nchw, w1, w2, w3, bn1, bn2, bn3):
    x = jnp.transpose(x_nchw, (0, 2, 3, 1)).astype(jnp.float32)
    dn = ("NHWC", "HWIO", "NHWC")

    def bn(y, p):
        gamma, beta, mean, var = p
        return (y - mean) * (gamma * jax.lax.rsqrt(var + BN_EPS)) + beta

    y = jax.lax.conv_general_dilated(x, w1, (1, 1), "VALID", dimension_numbers=dn)
    y = jnp.maximum(bn(y, bn1), 0.0)
    y = jax.lax.conv_general_dilated(y, w2, (1, 1), "SAME", dimension_numbers=dn)
    y = jnp.maximum(bn(y, bn2), 0.0)
    y = jax.lax.conv_general_dilated(y, w3, (1, 1), "VALID", dimension_numbers=dn)
    y = bn(y, bn3)
    y = jnp.maximum(y + x, 0.0)
    return jnp.transpose(y, (0, 3, 1, 2))


# ---------------------------------------------------------------------------

if __name__ == "__main__":
    B, planes, H, W = 2, 4, 16, 16
    inplanes = planes * 4                    # identity residual path (downsample=None)

    key = jax.random.PRNGKey(0)
    ks = jax.random.split(key, 8)

    x = jax.random.normal(ks[0], (B, inplanes, H, W), dtype=jnp.float32)

    def bn_params(k, c):
        k1, k2, k3, k4 = jax.random.split(k, 4)
        gamma = 1.0 + 0.1 * jax.random.normal(k1, (c,), jnp.float32)
        beta = 0.1 * jax.random.normal(k2, (c,), jnp.float32)
        mean = 0.1 * jax.random.normal(k3, (c,), jnp.float32)
        var = jnp.abs(jax.random.normal(k4, (c,), jnp.float32)) + 0.5
        return gamma, beta, mean, var

    # Conv weights in HWIO layout (deterministic synthetic init).
    w1 = 0.2 * jax.random.normal(ks[1], (1, 1, inplanes, planes), jnp.float32)
    w2 = 0.2 * jax.random.normal(ks[2], (3, 3, planes, planes), jnp.float32)
    w3 = 0.2 * jax.random.normal(ks[3], (1, 1, planes, inplanes), jnp.float32)
    bn1 = bn_params(ks[4], planes)
    bn2 = bn_params(ks[5], planes)
    bn3 = bn_params(ks[6], inplanes)

    ref = _reference_forward(x, w1, w2, w3, bn1, bn2, bn3)

    # Multi-tile path (exercises first / middle / last tile halo logic): TH = 4.
    out_tiled = bottleneck_forward(x, w1, w2, w3, bn1, bn2, bn3, tile_rows=4)
    out_tiled = jax.block_until_ready(out_tiled)
    assert out_tiled.shape == (B, inplanes, H, W), out_tiled.shape
    err1 = float(jnp.max(jnp.abs(out_tiled - ref)))
    assert jnp.allclose(out_tiled, ref, atol=1e-4, rtol=1e-4), err1

    # Single-tile path (whole image per grid step): default tile selection.
    out_full = bottleneck_forward(x, w1, w2, w3, bn1, bn2, bn3)
    out_full = jax.block_until_ready(out_full)
    err2 = float(jnp.max(jnp.abs(out_full - ref)))
    assert jnp.allclose(out_full, ref, atol=1e-4, rtol=1e-4), err2

    print("KERNEL_OK")
</pallas_src>

<mosaic_0001>
module attributes {stable_mosaic.version = 11 : i64} {
  func.func @_bottleneck_kernel(%arg0: i32, %arg1: i32, %arg2: memref<1x64x16xf32, #tpu.memory_space<vmem>>, %arg3: memref<1x16x16xf32, #tpu.memory_space<vmem>>, %arg4: memref<1x16x16xf32, #tpu.memory_space<vmem>>, %arg5: memref<96x1xf32, #tpu.memory_space<vmem>>, %arg6: memref<96x1xf32, #tpu.memory_space<vmem>>, %arg7: memref<16x4xf32, #tpu.memory_space<vmem>>, %arg8: memref<1x4xf32, #tpu.memory_space<vmem>>, %arg9: memref<36x4xf32, #tpu.memory_space<vmem>>, %arg10: memref<1x4xf32, #tpu.memory_space<vmem>>, %arg11: memref<4x16xf32, #tpu.memory_space<vmem>>, %arg12: memref<1x16xf32, #tpu.memory_space<vmem>>, %arg13: memref<1x64x16xf32, #tpu.memory_space<vmem>>) attributes {dimension_semantics = [#tpu.dimension_semantics<parallel>, #tpu.dimension_semantics<parallel>], iteration_bounds = array<i64: 2, 4>, scalar_prefetch = 0 : i64, scratch_operands = 0 : i64, tpu.core_type = #tpu.core_type<tc>, window_params = [{transform_indices = @transform_0, window_bounds = array<i64: 1, 64, 16>}, {transform_indices = @transform_1, window_bounds = array<i64: 1, 16, 16>}, {transform_indices = @transform_2, window_bounds = array<i64: 1, 16, 16>}, {pipeline_mode = #tpu.pipeline_mode<synchronous>, transform_indices = @transform_3, window_bounds = array<i64: 96, 1>}, {pipeline_mode = #tpu.pipeline_mode<synchronous>, transform_indices = @transform_4, window_bounds = array<i64: 96, 1>}, {pipeline_mode = #tpu.pipeline_mode<synchronous>, transform_indices = @transform_5, window_bounds = array<i64: 16, 4>}, {pipeline_mode = #tpu.pipeline_mode<synchronous>, transform_indices = @transform_6, window_bounds = array<i64: 1, 4>}, {pipeline_mode = #tpu.pipeline_mode<synchronous>, transform_indices = @transform_7, window_bounds = array<i64: 36, 4>}, {pipeline_mode = #tpu.pipeline_mode<synchronous>, transform_indices = @transform_8, window_bounds = array<i64: 1, 4>}, {pipeline_mode = #tpu.pipeline_mode<synchronous>, transform_indices = @transform_9, window_bounds = array<i64: 4, 16>}, {pipeline_mode = #tpu.pipeline_mode<synchronous>, transform_indices = @transform_10, window_bounds = array<i64: 1, 16>}, {transform_indices = @transform_11, window_bounds = array<i64: 1, 64, 16>}]} {
    %c0 = arith.constant 0 : index
    %c0_0 = arith.constant 0 : index
    %c0_1 = arith.constant 0 : index
    %0 = vector.load %arg2[%c0, %c0_0, %c0_1] : memref<1x64x16xf32, #tpu.memory_space<vmem>>, vector<1x64x16xf32>
    %1 = vector.shape_cast %0 : vector<1x64x16xf32> to vector<64x16xf32>
    %c0_2 = arith.constant 0 : index
    %c0_3 = arith.constant 0 : index
    %2 = vector.load %arg7[%c0_2, %c0_3] : memref<16x4xf32, #tpu.memory_space<vmem>>, vector<16x4xf32>
    %c0_4 = arith.constant 0 : index
    %c0_5 = arith.constant 0 : index
    %3 = vector.load %arg8[%c0_4, %c0_5] : memref<1x4xf32, #tpu.memory_space<vmem>>, vector<1x4xf32>
    %cst = arith.constant dense<0.000000e+00> : vector<64x4xf32>
    %4 = tpu.matmul %1, %2, %cst {dimension_numbers = #tpu.dot_dimension_numbers<[1], [0], [0], [1], [0, 0, 1, 1], [], []>} : vector<64x16xf32>, vector<16x4xf32>, vector<64x4xf32> -> vector<64x4xf32>
    %5 = vector.broadcast %3 : vector<1x4xf32> to vector<64x4xf32>
    %6 = arith.addf %4, %5 : vector<64x4xf32>
    %cst_6 = arith.constant 0.000000e+00 : f32
    %7 = vector.broadcast %cst_6 : f32 to vector<64x4xf32>
    %8 = arith.maximumf %6, %7 : vector<64x4xf32>
    %c0_7 = arith.constant 0 : index
    %c0_8 = arith.constant 0 : index
    %c0_9 = arith.constant 0 : index
    %9 = vector.load %arg3[%c0_7, %c0_8, %c0_9] : memref<1x16x16xf32, #tpu.memory_space<vmem>>, vector<1x16x16xf32>
    %10 = vector.shape_cast %9 : vector<1x16x16xf32> to vector<16x16xf32>
    %cst_10 = arith.constant dense<0.000000e+00> : vector<16x4xf32>
    %11 = tpu.matmul %10, %2, %cst_10 {dimension_numbers = #tpu.dot_dimension_numbers<[1], [0], [0], [1], [0, 0, 1, 1], [], []>} : vector<16x16xf32>, vector<16x4xf32>, vector<16x4xf32> -> vector<16x4xf32>
    %12 = vector.broadcast %3 : vector<1x4xf32> to vector<16x4xf32>
    %13 = arith.addf %11, %12 : vector<16x4xf32>
    %cst_11 = arith.constant 0.000000e+00 : f32
    %14 = vector.broadcast %cst_11 : f32 to vector<16x4xf32>
    %15 = arith.maximumf %13, %14 : vector<16x4xf32>
    %c0_i32 = arith.constant 0 : i32
    %16 = arith.cmpi sgt, %arg1, %c0_i32 : i32
    %17 = arith.extui %16 : i1 to i32
    %18 = arith.sitofp %17 : i32 to f32
    %19 = vector.broadcast %18 : f32 to vector<16x4xf32>
    %20 = arith.mulf %15, %19 : vector<16x4xf32>
    %c0_12 = arith.constant 0 : index
    %c0_13 = arith.constant 0 : index
    %c0_14 = arith.constant 0 : index
    %21 = vector.load %arg4[%c0_12, %c0_13, %c0_14] : memref<1x16x16xf32, #tpu.memory_space<vmem>>, vector<1x16x16xf32>
    %22 = vector.shape_cast %21 : vector<1x16x16xf32> to vector<16x16xf32>
    %cst_15 = arith.constant dense<0.000000e+00> : vector<16x4xf32>
    %23 = tpu.matmul %22, %2, %cst_15 {dimension_numbers = #tpu.dot_dimension_numbers<[1], [0], [0], [1], [0, 0, 1, 1], [], []>} : vector<16x16xf32>, vector<16x4xf32>, vector<16x4xf32> -> vector<16x4xf32>
    %24 = vector.broadcast %3 : vector<1x4xf32> to vector<16x4xf32>
    %25 = arith.addf %23, %24 : vector<16x4xf32>
    %cst_16 = arith.constant 0.000000e+00 : f32
    %26 = vector.broadcast %cst_16 : f32 to vector<16x4xf32>
    %27 = arith.maximumf %25, %26 : vector<16x4xf32>
    %c3_i32 = arith.constant 3 : i32
    %28 = arith.cmpi slt, %arg1, %c3_i32 : i32
    %29 = arith.extui %28 : i1 to i32
    %30 = arith.sitofp %29 : i32 to f32
    %31 = vector.broadcast %30 : f32 to vector<16x4xf32>
    %32 = arith.mulf %27, %31 : vector<16x4xf32>
    %33 = tpu.concatenate %20, %8, %32 in 0 : vector<16x4xf32>, vector<64x4xf32>, vector<16x4xf32> -> vector<96x4xf32>
    %c1_i32 = arith.constant 1 : i32
    %34 = tpu.dynamic_rotate %33 by %c1_i32 dim 0 : vector<96x4xf32>, i32 -> vector<96x4xf32>
    %c0_17 = arith.constant 0 : index
    %c0_18 = arith.constant 0 : index
    %35 = vector.load %arg5[%c0_17, %c0_18] : memref<96x1xf32, #tpu.memory_space<vmem>>, vector<96x1xf32>
    %36 = vector.broadcast %35 : vector<96x1xf32> to vector<96x4xf32>
    %37 = arith.mulf %34, %36 : vector<96x4xf32>
    %c95_i32 = arith.constant 95 : i32
    %38 = tpu.dynamic_rotate %33 by %c95_i32 dim 0 : vector<96x4xf32>, i32 -> vector<96x4xf32>
    %c0_19 = arith.constant 0 : index
    %c0_20 = arith.constant 0 : index
    %39 = vector.load %arg6[%c0_19, %c0_20] : memref<96x1xf32, #tpu.memory_space<vmem>>, vector<96x1xf32>
    %40 = vector.broadcast %39 : vector<96x1xf32> to vector<96x4xf32>
    %41 = arith.mulf %38, %40 : vector<96x4xf32>
    %42 = tpu.concatenate %37, %33, %41 in 1 : vector<96x4xf32>, vector<96x4xf32>, vector<96x4xf32> -> vector<96x12xf32>
    %43 = vector.extract_strided_slice %42 {offsets = [0, 0], sizes = [64, 12], strides = [1, 1]} : vector<96x12xf32> to vector<64x12xf32>
    %44 = vector.extract_strided_slice %42 {offsets = [16, 0], sizes = [64, 12], strides = [1, 1]} : vector<96x12xf32> to vector<64x12xf32>
    %45 = vector.extract_strided_slice %42 {offsets = [32, 0], sizes = [64, 12], strides = [1, 1]} : vector<96x12xf32> to vector<64x12xf32>
    %46 = tpu.concatenate %43, %44, %45 in 1 : vector<64x12xf32>, vector<64x12xf32>, vector<64x12xf32> -> vector<64x36xf32>
    %c0_21 = arith.constant 0 : index
    %c0_22 = arith.constant 0 : index
    %47 = vector.load %arg9[%c0_21, %c0_22] : memref<36x4xf32, #tpu.memory_space<vmem>>, vector<36x4xf32>
    %cst_23 = arith.constant dense<0.000000e+00> : vector<64x4xf32>
    %48 = tpu.matmul %46, %47, %cst_23 {dimension_numbers = #tpu.dot_dimension_numbers<[1], [0], [0], [1], [0, 0, 1, 1], [], []>} : vector<64x36xf32>, vector<36x4xf32>, vector<64x4xf32> -> vector<64x4xf32>
    %c0_24 = arith.constant 0 : index
    %c0_25 = arith.constant 0 : index
    %49 = vector.load %arg10[%c0_24, %c0_25] : memref<1x4xf32, #tpu.memory_space<vmem>>, vector<1x4xf32>
    %50 = vector.broadcast %49 : vector<1x4xf32> to vector<64x4xf32>
    %51 = arith.addf %48, %50 : vector<64x4xf32>
    %cst_26 = arith.constant 0.000000e+00 : f32
    %52 = vector.broadcast %cst_26 : f32 to vector<64x4xf32>
    %53 = arith.maximumf %51, %52 : vector<64x4xf32>
    %c0_27 = arith.constant 0 : index
    %c0_28 = arith.constant 0 : index
    %54 = vector.load %arg11[%c0_27, %c0_28] : memref<4x16xf32, #tpu.memory_space<vmem>>, vector<4x16xf32>
    %cst_29 = arith.constant dense<0.000000e+00> : vector<64x16xf32>
    %55 = tpu.matmul %53, %54, %cst_29 {dimension_numbers = #tpu.dot_dimension_numbers<[1], [0], [0], [1], [0, 0, 1, 1], [], []>} : vector<64x4xf32>, vector<4x16xf32>, vector<64x16xf32> -> vector<64x16xf32>
    %c0_30 = arith.constant 0 : index
    %c0_31 = arith.constant 0 : index
    %56 = vector.load %arg12[%c0_30, %c0_31] : memref<1x16xf32, #tpu.memory_space<vmem>>, vector<1x16xf32>
    %57 = vector.broadcast %56 : vector<1x16xf32> to vector<64x16xf32>
    %58 = arith.addf %55, %57 : vector<64x16xf32>
    %59 = arith.addf %58, %1 : vector<64x16xf32>
    %cst_32 = arith.constant 0.000000e+00 : f32
    %60 = vector.broadcast %cst_32 : f32 to vector<64x16xf32>
    %61 = arith.maximumf %59, %60 : vector<64x16xf32>
    %c0_33 = arith.constant 0 : index
    %c0_34 = arith.constant 0 : index
    %c0_35 = arith.constant 0 : index
    %62 = vector.load %arg13[%c0_33, %c0_34, %c0_35] : memref<1x64x16xf32, #tpu.memory_space<vmem>>, vector<1x64x16xf32>
    %63 = vector.shape_cast %62 : vector<1x64x16xf32> to vector<64x16xf32>
    %64 = vector.shape_cast %61 : vector<64x16xf32> to vector<1x64x16xf32>
    tpu.vector_store %arg13[%c0_33, %c0_34, %c0_35], %64 {strides = array<i32>} : memref<1x64x16xf32, #tpu.memory_space<vmem>>, vector<1x64x16xf32>,
    return
  }
  func.func @transform_0(%arg0: i32, %arg1: i32) -> (i32, i32, i32) {
    %c0_i32 = arith.constant 0 : i32
    %c0_i32_0 = arith.constant 0 : i32
    return %arg0, %arg1, %c0_i32 : i32, i32, i32
  }
  func.func @transform_1(%arg0: i32, %arg1: i32) -> (i32, i32, i32) {
    %c4_i32 = arith.constant 4 : i32
    %0 = arith.muli %arg1, %c4_i32 : i32
    %c1_i32 = arith.constant 1 : i32
    %1 = arith.subi %0, %c1_i32 : i32
    %c0_i32 = arith.constant 0 : i32
    %2 = arith.maxsi %1, %c0_i32 : i32
    %c0_i32_0 = arith.constant 0 : i32
    %c0_i32_1 = arith.constant 0 : i32
    return %arg0, %2, %c0_i32_0 : i32, i32, i32
  }
  func.func @transform_2(%arg0: i32, %arg1: i32) -> (i32, i32, i32) {
    %c4_i32 = arith.constant 4 : i32
    %0 = arith.muli %arg1, %c4_i32 : i32
    %c4_i32_0 = arith.constant 4 : i32
    %1 = arith.addi %0, %c4_i32_0 : i32
    %c15_i32 = arith.constant 15 : i32
    %2 = arith.minsi %1, %c15_i32 : i32
    %c0_i32 = arith.constant 0 : i32
    %c0_i32_1 = arith.constant 0 : i32
    return %arg0, %2, %c0_i32 : i32, i32, i32
  }
  func.func @transform_3(%arg0: i32, %arg1: i32) -> (i32, i32) {
    %c0_i32 = arith.constant 0 : i32
    %c0_i32_0 = arith.constant 0 : i32
    %c0_i32_1 = arith.constant 0 : i32
    return %c0_i32, %c0_i32_0 : i32, i32
  }
  func.func @transform_4(%arg0: i32, %arg1: i32) -> (i32, i32) {
    %c0_i32 = arith.constant 0 : i32
    %c0_i32_0 = arith.constant 0 : i32
    %c0_i32_1 = arith.constant 0 : i32
    return %c0_i32, %c0_i32_0 : i32, i32
  }
  func.func @transform_5(%arg0: i32, %arg1: i32) -> (i32, i32) {
    %c0_i32 = arith.constant 0 : i32
    %c0_i32_0 = arith.constant 0 : i32
    %c0_i32_1 = arith.constant 0 : i32
    return %c0_i32, %c0_i32_0 : i32, i32
  }
  func.func @transform_6(%arg0: i32, %arg1: i32) -> (i32, i32) {
    %c0_i32 = arith.constant 0 : i32
    %c0_i32_0 = arith.constant 0 : i32
    %c0_i32_1 = arith.constant 0 : i32
    return %c0_i32, %c0_i32_0 : i32, i32
  }
  func.func @transform_7(%arg0: i32, %arg1: i32) -> (i32, i32) {
    %c0_i32 = arith.constant 0 : i32
    %c0_i32_0 = arith.constant 0 : i32
    %c0_i32_1 = arith.constant 0 : i32
    return %c0_i32, %c0_i32_0 : i32, i32
  }
  func.func @transform_8(%arg0: i32, %arg1: i32) -> (i32, i32) {
    %c0_i32 = arith.constant 0 : i32
    %c0_i32_0 = arith.constant 0 : i32
    %c0_i32_1 = arith.constant 0 : i32
    return %c0_i32, %c0_i32_0 : i32, i32
  }
  func.func @transform_9(%arg0: i32, %arg1: i32) -> (i32, i32) {
    %c0_i32 = arith.constant 0 : i32
    %c0_i32_0 = arith.constant 0 : i32
    %c0_i32_1 = arith.constant 0 : i32
    return %c0_i32, %c0_i32_0 : i32, i32
  }
  func.func @transform_10(%arg0: i32, %arg1: i32) -> (i32, i32) {
    %c0_i32 = arith.constant 0 : i32
    %c0_i32_0 = arith.constant 0 : i32
    %c0_i32_1 = arith.constant 0 : i32
    return %c0_i32, %c0_i32_0 : i32, i32
  }
  func.func @transform_11(%arg0: i32, %arg1: i32) -> (i32, i32, i32) {
    %c0_i32 = arith.constant 0 : i32
    %c0_i32_0 = arith.constant 0 : i32
    return %arg0, %arg1, %c0_i32 : i32, i32, i32
  }
}

</mosaic_0001>

<llo_original>
// kernel: tpu_custom_call.1
$region0: #{tpu_custom_call.1}
  #allocation0 [shape = 'u32[]', space=smem, size = 0x4, offset = 0x4, fixed_abs, tag = 'smem constant byte address 0x4 - core index']
  #allocation1 [shape = 'u32[144,128]{1,0:T(1,128)}', space=vmem, size = 0x12000, scoped, tag = 'internal scratch']
  %s0 = inlined_call_operand.vmem [shape: f32[2,256,16], index: 0, kind: input, shape index: {}]
  %s1 = inlined_call_operand.vmem [shape: f32[2,256,16], index: 1, kind: input, shape index: {}]
  %s2 = inlined_call_operand.vmem [shape: f32[2,256,16], index: 2, kind: input, shape index: {}]
  %s3 = inlined_call_operand.vmem [shape: f32[96,1], index: 3, kind: input, shape index: {}]
  %s4 = inlined_call_operand.vmem [shape: f32[96,1], index: 4, kind: input, shape index: {}]
  %s5 = inlined_call_operand.vmem [shape: f32[16,4], index: 5, kind: input, shape index: {}]
  %s6 = inlined_call_operand.vmem [shape: f32[1,4], index: 6, kind: input, shape index: {}]
  %s7 = inlined_call_operand.vmem [shape: f32[36,4], index: 7, kind: input, shape index: {}]
  %s8 = inlined_call_operand.vmem [shape: f32[1,4], index: 8, kind: input, shape index: {}]
  %s9 = inlined_call_operand.vmem [shape: f32[4,16], index: 9, kind: input, shape index: {}]
  %s10 = inlined_call_operand.vmem [shape: f32[1,16], index: 10, kind: input, shape index: {}]
  %s11 = inlined_call_operand.vmem [shape: f32[2,256,16], index: 11, kind: output, shape index: {}]
  %s12 = sld [smem:[#allocation0]]
  $region77: #{tpu_custom_call.1} parent=0
    _
  %s14 = ssub.s32 1, %s12
  %s15 = scalar_select 0, %s14, %s12
  loop: start=0, step=1, limit=10
  $region2: #{tpu_custom_call.1} parent=0 // loop_pre_header
    _
  $region3: #{tpu_custom_call.1} parent=0 // loop_header
    %s17 = sphi 0, %s21
    %p18 = scmp.ge.s32.totalorder %s17, 10
    %s24 = sphi 0, %s36
    %s25 = sphi 0, %s32
    %s26 = sphi 0, %s24
    %s27 = sphi 0, %s25
    %s28 = sphi 0, %s26
    %s29 = sphi 0, %s27
    %s41 = sphi 0, %s43
    %s44 = sphi 0, %s41
    %s45 = sphi 0, %s44
    %s61 = sphi 0, %s45
    %s77 = sphi 0, %s79
    %s80 = sphi 0, %s77
    %s81 = sphi 0, %s80
    %s97 = sphi 0, %s81
    %s113 = sphi 0, %s115
    %s116 = sphi 0, %s113
    %s117 = sphi 0, %s116
    %s133 = sphi 0, %s117
    %s137 = sphi 0, %s137
    %s139 = sphi 0, %s137
    %s140 = sphi 0, %s139
    %s154 = sphi 0, %s140
    %s158 = sphi 0, %s158
    %s160 = sphi 0, %s158
    %s161 = sphi 0, %s160
    %s175 = sphi 0, %s161
    %s179 = sphi 0, %s179
    %s181 = sphi 0, %s179
    %s182 = sphi 0, %s181
    %s196 = sphi 0, %s182
    %s200 = sphi 0, %s200
    %s202 = sphi 0, %s200
    %s203 = sphi 0, %s202
    %s217 = sphi 0, %s203
    %s221 = sphi 0, %s221
    %s223 = sphi 0, %s221
    %s224 = sphi 0, %s223
    %s238 = sphi 0, %s224
    %s242 = sphi 0, %s242
    %s244 = sphi 0, %s242
    %s245 = sphi 0, %s244
    %s259 = sphi 0, %s245
    %s263 = sphi 0, %s263
    %s265 = sphi 0, %s263
    %s266 = sphi 0, %s265
    %s280 = sphi 0, %s266
    %s284 = sphi 0, %s284
    %s286 = sphi 0, %s284
    %s287 = sphi 0, %s286
    %s301 = sphi 0, %s287
    %s309 = sphi 0, %s311
    %s312 = sphi 0, %s309
    %s313 = sphi 0, %s312
    %s329 = sphi 0, %s313
  $region4: #{tpu_custom_call.1} parent=0 // loop_header_branch
    %20 = sbr.rel (%p18) target = $region8
  $region5: #{tpu_custom_call.1} parent=0 // loop_body
    %s22 = ssub.s32 %s17, 1
    %s23 = ssub.s32 %s17, 2
    %s30 = sadd.s32 1, %s25
    %p31 = scmp.ge.s32.totalorder %s30, 4
    %s32 = scalar_select %p31, 0, %s30
    %s33 = sadd.s32 1, %s24
    %s34 = scalar_select %p31, %s33, %s24
    %p35 = scmp.ge.s32.totalorder %s34, 2
    %s36 = scalar_select %p35, 0, %s34
    %s37 = ssub.s32 %s24, %s36
    %s38 = ssub.s32 %s25, %s32
    %s39 = sor.u32 %s37, %s38
    %p40 = scmp.eq.s32.totalorder %s39, 0
    %s42 = sadd.s32 %s41, 1
    %s43 = scalar_select %p40, %s41, %s42
    %p46 = pneg %p40
    %p47 = scmp.eq.s32.totalorder %s17, 7
    %p48 = por %p46, %p47
    %p49 = scmp.ne.s32.totalorder %s41, %s44
    %p50 = scmp.eq.s32.totalorder %s17, 0
    %p51 = por %p49, %p50
    %p52 = scmp.ne.s32.totalorder %s41, %s44
    %p53 = scmp.eq.s32.totalorder %s22, 7
    %p54 = por %p52, %p53
    %p55 = scmp.ne.s32.totalorder %s44, %s45
    %p56 = scmp.eq.s32.totalorder %s22, 0
    %p57 = por %p55, %p56
    %p58 = scmp.ne.s32.totalorder %s44, %s45
    %p59 = scmp.eq.s32.totalorder %s23, 7
    %p60 = por %p58, %p59
    %p62 = scmp.ne.s32.totalorder %s45, %s61
    %p63 = scmp.eq.s32.totalorder %s23, 0
    %p64 = por %p62, %p63
    %s65 = smul.u32 %s25, 4
    %s66 = ssub.s32 %s65, 1
    %p67 = scmp.gt.s32.totalorder %s66, 0
    %s68 = scalar_select %p67, %s66, 0
    %s69 = smul.u32 %s32, 4
    %s70 = ssub.s32 %s69, 1
    %p71 = scmp.gt.s32.totalorder %s70, 0
    %s72 = scalar_select %p71, %s70, 0
    %s73 = ssub.s32 %s24, %s36
    %s74 = ssub.s32 %s68, %s72
    %s75 = sor.u32 %s73, %s74
    %p76 = scmp.eq.s32.totalorder %s75, 0
    %s78 = sadd.s32 %s77, 1
    %s79 = scalar_select %p76, %s77, %s78
    %p82 = pneg %p76
    %p83 = scmp.eq.s32.totalorder %s17, 7
    %p84 = por %p82, %p83
    %p85 = scmp.ne.s32.totalorder %s77, %s80
    %p86 = scmp.eq.s32.totalorder %s17, 0
    %p87 = por %p85, %p86
    %p88 = scmp.ne.s32.totalorder %s77, %s80
    %p89 = scmp.eq.s32.totalorder %s22, 7
    %p90 = por %p88, %p89
    %p91 = scmp.ne.s32.totalorder %s80, %s81
    %p92 = scmp.eq.s32.totalorder %s22, 0
    %p93 = por %p91, %p92
    %p94 = scmp.ne.s32.totalorder %s80, %s81
    %p95 = scmp.eq.s32.totalorder %s23, 7
    %p96 = por %p94, %p95
    %p98 = scmp.ne.s32.totalorder %s81, %s97
    %p99 = scmp.eq.s32.totalorder %s23, 0
    %p100 = por %p98, %p99
    %s101 = smul.u32 %s25, 4
    %s102 = sadd.s32 %s101, 4
    %p103 = scmp.lt.s32.totalorder %s102, 15
    %s104 = scalar_select %p103, %s102, 15
    %s105 = smul.u32 %s32, 4
    %s106 = sadd.s32 %s105, 4
    %p107 = scmp.lt.s32.totalorder %s106, 15
    %s108 = scalar_select %p107, %s106, 15
    %s109 = ssub.s32 %s24, %s36
    %s110 = ssub.s32 %s104, %s108
    %s111 = sor.u32 %s109, %s110
    %p112 = scmp.eq.s32.totalorder %s111, 0
    %s114 = sadd.s32 %s113, 1
    %s115 = scalar_select %p112, %s113, %s114
    %p118 = pneg %p112
    %p119 = scmp.eq.s32.totalorder %s17, 7
    %p120 = por %p118, %p119
    %p121 = scmp.ne.s32.totalorder %s113, %s116
    %p122 = scmp.eq.s32.totalorder %s17, 0
    %p123 = por %p121, %p122
    %p124 = scmp.ne.s32.totalorder %s113, %s116
    %p125 = scmp.eq.s32.totalorder %s22, 7
    %p126 = por %p124, %p125
    %p127 = scmp.ne.s32.totalorder %s116, %s117
    %p128 = scmp.eq.s32.totalorder %s22, 0
    %p129 = por %p127, %p128
    %p130 = scmp.ne.s32.totalorder %s116, %s117
    %p131 = scmp.eq.s32.totalorder %s23, 7
    %p132 = por %p130, %p131
    %p134 = scmp.ne.s32.totalorder %s117, %s133
    %p135 = scmp.eq.s32.totalorder %s23, 0
    %p136 = por %p134, %p135
    %s138 = sadd.s32 %s137, 1
    %p141 = scmp.eq.s32.totalorder %s17, 7
    %p142 = scmp.ne.s32.totalorder %s137, %s139
    %p143 = scmp.eq.s32.totalorder %s17, 0
    %p144 = por %p142, %p143
    %p145 = scmp.ne.s32.totalorder %s137, %s139
    %p146 = scmp.eq.s32.totalorder %s22, 7
    %p147 = por %p145, %p146
    %p148 = scmp.ne.s32.totalorder %s139, %s140
    %p149 = scmp.eq.s32.totalorder %s22, 0
    %p150 = por %p148, %p149
    %p151 = scmp.ne.s32.totalorder %s139, %s140
    %p152 = scmp.eq.s32.totalorder %s23, 7
    %p153 = por %p151, %p152
    %p155 = scmp.ne.s32.totalorder %s140, %s154
    %p156 = scmp.eq.s32.totalorder %s23, 0
    %p157 = por %p155, %p156
    %s159 = sadd.s32 %s158, 1
    %p162 = scmp.eq.s32.totalorder %s17, 7
    %p163 = scmp.ne.s32.totalorder %s158, %s160
    %p164 = scmp.eq.s32.totalorder %s17, 0
    %p165 = por %p163, %p164
    %p166 = scmp.ne.s32.totalorder %s158, %s160
    %p167 = scmp.eq.s32.totalorder %s22, 7
    %p168 = por %p166, %p167
    %p169 = scmp.ne.s32.totalorder %s160, %s161
    %p170 = scmp.eq.s32.totalorder %s22, 0
    %p171 = por %p169, %p170
    %p172 = scmp.ne.s32.totalorder %s160, %s161
    %p173 = scmp.eq.s32.totalorder %s23, 7
    %p174 = por %p172, %p173
    %p176 = scmp.ne.s32.totalorder %s161, %s175
    %p177 = scmp.eq.s32.totalorder %s23, 0
    %p178 = por %p176, %p177
    %s180 = sadd.s32 %s179, 1
    %p183 = scmp.eq.s32.totalorder %s17, 7
    %p184 = scmp.ne.s32.totalorder %s179, %s181
    %p185 = scmp.eq.s32.totalorder %s17, 0
    %p186 = por %p184, %p185
    %p187 = scmp.ne.s32.totalorder %s179, %s181
    %p188 = scmp.eq.s32.totalorder %s22, 7
    %p189 = por %p187, %p188
    %p190 = scmp.ne.s32.totalorder %s181, %s182
    %p191 = scmp.eq.s32.totalorder %s22, 0
    %p192 = por %p190, %p191
    %p193 = scmp.ne.s32.totalorder %s181, %s182
    %p194 = scmp.eq.s32.totalorder %s23, 7
    %p195 = por %p193, %p194
    %p197 = scmp.ne.s32.totalorder %s182, %s196
    %p198 = scmp.eq.s32.totalorder %s23, 0
    %p199 = por %p197, %p198
    %s201 = sadd.s32 %s200, 1
    %p204 = scmp.eq.s32.totalorder %s17, 7
    %p205 = scmp.ne.s32.totalorder %s200, %s202
    %p206 = scmp.eq.s32.totalorder %s17, 0
    %p207 = por %p205, %p206
    %p208 = scmp.ne.s32.totalorder %s200, %s202
    %p209 = scmp.eq.s32.totalorder %s22, 7
    %p210 = por %p208, %p209
    %p211 = scmp.ne.s32.totalorder %s202, %s203
    %p212 = scmp.eq.s32.totalorder %s22, 0
    %p213 = por %p211, %p212
    %p214 = scmp.ne.s32.totalorder %s202, %s203
    %p215 = scmp.eq.s32.totalorder %s23, 7
    %p216 = por %p214, %p215
    %p218 = scmp.ne.s32.totalorder %s203, %s217
    %p219 = scmp.eq.s32.totalorder %s23, 0
    %p220 = por %p218, %p219
    %s222 = sadd.s32 %s221, 1
    %p225 = scmp.eq.s32.totalorder %s17, 7
    %p226 = scmp.ne.s32.totalorder %s221, %s223
    %p227 = scmp.eq.s32.totalorder %s17, 0
    %p228 = por %p226, %p227
    %p229 = scmp.ne.s32.totalorder %s221, %s223
    %p230 = scmp.eq.s32.totalorder %s22, 7
    %p231 = por %p229, %p230
    %p232 = scmp.ne.s32.totalorder %s223, %s224
    %p233 = scmp.eq.s32.totalorder %s22, 0
    %p234 = por %p232, %p233
    %p235 = scmp.ne.s32.totalorder %s223, %s224
    %p236 = scmp.eq.s32.totalorder %s23, 7
    %p237 = por %p235, %p236
    %p239 = scmp.ne.s32.totalorder %s224, %s238
    %p240 = scmp.eq.s32.totalorder %s23, 0
    %p241 = por %p239, %p240
    %s243 = sadd.s32 %s242, 1
    %p246 = scmp.eq.s32.totalorder %s17, 7
    %p247 = scmp.ne.s32.totalorder %s242, %s244
    %p248 = scmp.eq.s32.totalorder %s17, 0
    %p249 = por %p247, %p248
    %p250 = scmp.ne.s32.totalorder %s242, %s244
    %p251 = scmp.eq.s32.totalorder %s22, 7
    %p252 = por %p250, %p251
    %p253 = scmp.ne.s32.totalorder %s244, %s245
    %p254 = scmp.eq.s32.totalorder %s22, 0
    %p255 = por %p253, %p254
    %p256 = scmp.ne.s32.totalorder %s244, %s245
    %p257 = scmp.eq.s32.totalorder %s23, 7
    %p258 = por %p256, %p257
    %p260 = scmp.ne.s32.totalorder %s245, %s259
    %p261 = scmp.eq.s32.totalorder %s23, 0
    %p262 = por %p260, %p261
    %s264 = sadd.s32 %s263, 1
    %p267 = scmp.eq.s32.totalorder %s17, 7
    %p268 = scmp.ne.s32.totalorder %s263, %s265
    %p269 = scmp.eq.s32.totalorder %s17, 0
    %p270 = por %p268, %p269
    %p271 = scmp.ne.s32.totalorder %s263, %s265
    %p272 = scmp.eq.s32.totalorder %s22, 7
    %p273 = por %p271, %p272
    %p274 = scmp.ne.s32.totalorder %s265, %s266
    %p275 = scmp.eq.s32.totalorder %s22, 0
    %p276 = por %p274, %p275
    %p277 = scmp.ne.s32.totalorder %s265, %s266
    %p278 = scmp.eq.s32.totalorder %s23, 7
    %p279 = por %p277, %p278
    %p281 = scmp.ne.s32.totalorder %s266, %s280
    %p282 = scmp.eq.s32.totalorder %s23, 0
    %p283 = por %p281, %p282
    %s285 = sadd.s32 %s284, 1
    %p288 = scmp.eq.s32.totalorder %s17, 7
    %p289 = scmp.ne.s32.totalorder %s284, %s286
    %p290 = scmp.eq.s32.totalorder %s17, 0
    %p291 = por %p289, %p290
    %p292 = scmp.ne.s32.totalorder %s284, %s286
    %p293 = scmp.eq.s32.totalorder %s22, 7
    %p294 = por %p292, %p293
    %p295 = scmp.ne.s32.totalorder %s286, %s287
    %p296 = scmp.eq.s32.totalorder %s22, 0
    %p297 = por %p295, %p296
    %p298 = scmp.ne.s32.totalorder %s286, %s287
    %p299 = scmp.eq.s32.totalorder %s23, 7
    %p300 = por %p298, %p299
    %p302 = scmp.ne.s32.totalorder %s287, %s301
    %p303 = scmp.eq.s32.totalorder %s23, 0
    %p304 = por %p302, %p303
    %s305 = ssub.s32 %s24, %s36
    %s306 = ssub.s32 %s25, %s32
    %s307 = sor.u32 %s305, %s306
    %p308 = scmp.eq.s32.totalorder %s307, 0
    %s310 = sadd.s32 %s309, 1
    %s311 = scalar_select %p308, %s309, %s310
    %p314 = pneg %p308
    %p315 = scmp.eq.s32.totalorder %s17, 7
    %p316 = por %p314, %p315
    %p317 = scmp.ne.s32.totalorder %s309, %s312
    %p318 = scmp.eq.s32.totalorder %s17, 0
    %p319 = por %p317, %p318
    %p320 = scmp.ne.s32.totalorder %s309, %s312
    %p321 = scmp.eq.s32.totalorder %s22, 7
    %p322 = por %p320, %p321
    %p323 = scmp.ne.s32.totalorder %s312, %s313
    %p324 = scmp.eq.s32.totalorder %s22, 0
    %p325 = por %p323, %p324
    %p326 = scmp.ne.s32.totalorder %s312, %s313
    %p327 = scmp.eq.s32.totalorder %s23, 7
    %p328 = por %p326, %p327
    %p330 = scmp.ne.s32.totalorder %s313, %s329
    %p331 = scmp.eq.s32.totalorder %s23, 0
    %p332 = por %p330, %p331
    %p333 = scmp.le.s32.totalorder 1, %s17
    %p334 = scmp.lt.s32.totalorder %s17, 9
    %p335 = pnand %p333, %p334
    %p336 = pneg %p335
    // Predicated region
    $region9: #{tpu_custom_call.1} parent=5 // pred_check
      _
    $region10: #{tpu_custom_call.1} parent=5 // pred_check_branch
      %338 = sbr.rel (%p335) target = $region12
    $region11: #{tpu_custom_call.1} parent=5 // pred_region
      %s339 = ssub.s32 %s17, 1
      // Predicated region
      $region13: #{tpu_custom_call.1} parent=11 // pred_check
        %p340 = pneg %p150
      $region14: #{tpu_custom_call.1} parent=11 // pred_check_branch
        %342 = sbr.rel (%p340) target = $region16
      $region15: #{tpu_custom_call.1} parent=11 // pred_region
        _
      $region16: #{tpu_custom_call.1} parent=11 // pred_fallthru
        _
      // Predicated region
      $region17: #{tpu_custom_call.1} parent=11 // pred_check
        %p343 = pneg %p171
      $region18: #{tpu_custom_call.1} parent=11 // pred_check_branch
        %345 = sbr.rel (%p343) target = $region20
      $region19: #{tpu_custom_call.1} parent=11 // pred_region
        _
      $region20: #{tpu_custom_call.1} parent=11 // pred_fallthru
        _
      // Predicated region
      $region21: #{tpu_custom_call.1} parent=11 // pred_check
        %p346 = pneg %p192
      $region22: #{tpu_custom_call.1} parent=11 // pred_check_branch
        %348 = sbr.rel (%p346) target = $region24
      $region23: #{tpu_custom_call.1} parent=11 // pred_region
        _
      $region24: #{tpu_custom_call.1} parent=11 // pred_fallthru
        _
      // Predicated region
      $region25: #{tpu_custom_call.1} parent=11 // pred_check
        %p349 = pneg %p213
      $region26: #{tpu_custom_call.1} parent=11 // pred_check_branch
        %351 = sbr.rel (%p349) target = $region28
      $region27: #{tpu_custom_call.1} parent=11 // pred_region
        _
      $region28: #{tpu_custom_call.1} parent=11 // pred_fallthru
        _
      // Predicated region
      $region29: #{tpu_custom_call.1} parent=11 // pred_check
        %p352 = pneg %p234
      $region30: #{tpu_custom_call.1} parent=11 // pred_check_branch
        %354 = sbr.rel (%p352) target = $region32
      $region31: #{tpu_custom_call.1} parent=11 // pred_region
        _
      $region32: #{tpu_custom_call.1} parent=11 // pred_fallthru
        _
      // Predicated region
      $region33: #{tpu_custom_call.1} parent=11 // pred_check
        %p355 = pneg %p255
      $region34: #{tpu_custom_call.1} parent=11 // pred_check_branch
        %357 = sbr.rel (%p355) target = $region36
      $region35: #{tpu_custom_call.1} parent=11 // pred_region
        _
      $region36: #{tpu_custom_call.1} parent=11 // pred_fallthru
        _
      // Predicated region
      $region37: #{tpu_custom_call.1} parent=11 // pred_check
        %p358 = pneg %p276
      $region38: #{tpu_custom_call.1} parent=11 // pred_check_branch
        %360 = sbr.rel (%p358) target = $region40
      $region39: #{tpu_custom_call.1} parent=11 // pred_region
        _
      $region40: #{tpu_custom_call.1} parent=11 // pred_fallthru
        _
      // Predicated region
      $region41: #{tpu_custom_call.1} parent=11 // pred_check
        %p361 = pneg %p297
      $region42: #{tpu_custom_call.1} parent=11 // pred_check_branch
        %363 = sbr.rel (%p361) target = $region44
      $region43: #{tpu_custom_call.1} parent=11 // pred_region
        _
      $region44: #{tpu_custom_call.1} parent=11 // pred_fallthru
        _
    $region12: #{tpu_custom_call.1} parent=5 // pred_fallthru
      _
    %p364 = scmp.lt.s32.totalorder %s17, 8
    // Predicated region
    $region45: #{tpu_custom_call.1} parent=5 // pred_check
      %p365 = pneg %p364
    $region46: #{tpu_custom_call.1} parent=5 // pred_check_branch
      %367 = sbr.rel (%p365) target = $region48
    $region47: #{tpu_custom_call.1} parent=5 // pred_region
      // Predicated region
      $region49: #{tpu_custom_call.1} parent=47 // pred_check
        %p368 = pneg %p51
      $region50: #{tpu_custom_call.1} parent=47 // pred_check_branch
        %370 = sbr.rel (%p368) target = $region52
      $region51: #{tpu_custom_call.1} parent=47 // pred_region
        %s371 = smul.u32 8, %s25
        %p372 = scmp.lt.s32.totalorder %s24, 1
        %s373 = scalar_select %p372, %s24, 1
        %p374 = scmp.lt.s32.totalorder %s371, 31
        %s375 = scalar_select %p374, %s371, 31
        %s376 = smul.addr %s373, 32
        %s377 = sadd.s32 %s375, %s376
        %s378 = smul.addr %s377, 8
        %s379 = scalar_lea.vmem %s0, %s378
        %s380 = smul.u32 8, %s25
      $region52: #{tpu_custom_call.1} parent=47 // pred_fallthru
        _
      // Predicated region
      $region53: #{tpu_custom_call.1} parent=47 // pred_check
        %p381 = pneg %p87
      $region54: #{tpu_custom_call.1} parent=47 // pred_check_branch
        %383 = sbr.rel (%p381) target = $region56
      $region55: #{tpu_custom_call.1} parent=47 // pred_region
        %s384 = smul.u32 %s25, 4
        %s385 = ssub.s32 %s384, 1
        %p386 = scmp.gt.s32.totalorder %s385, 0
        %s387 = scalar_select %p386, %s385, 0
        %s388 = smul.u32 2, %s387
        %p389 = scmp.lt.s32.totalorder %s24, 1
        %s390 = scalar_select %p389, %s24, 1
        %p391 = scmp.lt.s32.totalorder %s388, 31
        %s392 = scalar_select %p391, %s388, 31
        %s393 = smul.addr %s390, 32
        %s394 = sadd.s32 %s392, %s393
        %s395 = smul.addr %s394, 8
        %s396 = scalar_lea.vmem %s1, %s395
        %s397 = smul.u32 %s25, 4
        %s398 = ssub.s32 %s397, 1
        %p399 = scmp.gt.s32.totalorder %s398, 0
        %s400 = scalar_select %p399, %s398, 0
        %s401 = smul.u32 2, %s400
      $region56: #{tpu_custom_call.1} parent=47 // pred_fallthru
        _
      // Predicated region
      $region57: #{tpu_custom_call.1} parent=47 // pred_check
        %p402 = pneg %p123
      $region58: #{tpu_custom_call.1} parent=47 // pred_check_branch
        %404 = sbr.rel (%p402) target = $region60
      $region59: #{tpu_custom_call.1} parent=47 // pred_region
        %s405 = smul.u32 %s25, 4
        %s406 = sadd.s32 %s405, 4
        %p407 = scmp.lt.s32.totalorder %s406, 15
        %s408 = scalar_select %p407, %s406, 15
        %s409 = smul.u32 2, %s408
        %p410 = scmp.lt.s32.totalorder %s24, 1
        %s411 = scalar_select %p410, %s24, 1
        %p412 = scmp.lt.s32.totalorder %s409, 31
        %s413 = scalar_select %p412, %s409, 31
        %s414 = smul.addr %s411, 32
        %s415 = sadd.s32 %s413, %s414
        %s416 = smul.addr %s415, 8
        %s417 = scalar_lea.vmem %s2, %s416
        %s418 = smul.u32 %s25, 4
        %s419 = sadd.s32 %s418, 4
        %p420 = scmp.lt.s32.totalorder %s419, 15
        %s421 = scalar_select %p420, %s419, 15
        %s422 = smul.u32 2, %s421
      $region60: #{tpu_custom_call.1} parent=47 // pred_fallthru
        _
    $region48: #{tpu_custom_call.1} parent=5 // pred_fallthru
      _
    %p423 = scmp.le.s32.totalorder 1, %s17
    %p424 = scmp.lt.s32.totalorder %s17, 9
    %p425 = pnand %p423, %p424
    %p426 = pneg %p425
    // Predicated region
    $region61: #{tpu_custom_call.1} parent=5 // pred_check
      _
    $region62: #{tpu_custom_call.1} parent=5 // pred_check_branch
      %428 = sbr.rel (%p425) target = $region64
    $region63: #{tpu_custom_call.1} parent=5 // pred_region
      %s429 = ssub.s32 %s17, 1
      %s430 = smul.u32 8, %s27
      %p431 = scmp.lt.s32.totalorder %s26, 1
      %s432 = scalar_select %p431, %s26, 1
      %p433 = scmp.lt.s32.totalorder %s430, 31
      %s434 = scalar_select %p433, %s430, 31
      %s435 = smul.addr %s432, 32
      %s436 = sadd.s32 %s434, %s435
      %s437 = smul.addr %s436, 8
      %s438 = scalar_lea.vmem %s0, %s437
      %p439 = pneg %p57
      %p440 = pneg %p54
      %s441 = smul.u32 %s27, 4
      %s442 = ssub.s32 %s441, 1
      %p443 = scmp.gt.s32.totalorder %s442, 0
      %s444 = scalar_select %p443, %s442, 0
      %s445 = smul.u32 2, %s444
      %p446 = scmp.lt.s32.totalorder %s26, 1
      %s447 = scalar_select %p446, %s26, 1
      %p448 = scmp.lt.s32.totalorder %s445, 31
      %s449 = scalar_select %p448, %s445, 31
      %s450 = smul.addr %s447, 32
      %s451 = sadd.s32 %s449, %s450
      %s452 = smul.addr %s451, 8
      %s453 = scalar_lea.vmem %s1, %s452
      %p454 = pneg %p93
      %p455 = pneg %p90
      %s456 = smul.u32 %s27, 4
      %s457 = sadd.s32 %s456, 4
      %p458 = scmp.lt.s32.totalorder %s457, 15
      %s459 = scalar_select %p458, %s457, 15
      %s460 = smul.u32 2, %s459
      %p461 = scmp.lt.s32.totalorder %s26, 1
      %s462 = scalar_select %p461, %s26, 1
      %p463 = scmp.lt.s32.totalorder %s460, 31
      %s464 = scalar_select %p463, %s460, 31
      %s465 = smul.addr %s462, 32
      %s466 = sadd.s32 %s464, %s465
      %s467 = smul.addr %s466, 8
      %s468 = scalar_lea.vmem %s2, %s467
      %p469 = pneg %p129
      %p470 = pneg %p126
      %p471 = pneg %p150
      %p472 = pneg %p147
      %p473 = pneg %p171
      %p474 = pneg %p168
      %p475 = pneg %p192
      %p476 = pneg %p189
      %p477 = pneg %p213
      %p478 = pneg %p210
      %p479 = pneg %p234
      %p480 = pneg %p231
      %p481 = pneg %p255
      %p482 = pneg %p252
      %p483 = pneg %p276
      %p484 = pneg %p273
      %p485 = pneg %p297
      %p486 = pneg %p294
      %p487 = pneg %p325
      %p488 = pneg %p322
      %s489 = smul.u32 8, %s27
      %p490 = scmp.lt.s32.totalorder %s26, 1
      %s491 = scalar_select %p490, %s26, 1
      %p492 = scmp.lt.s32.totalorder %s489, 31
      %s493 = scalar_select %p492, %s489, 31
      %s494 = smul.addr %s491, 32
      %s495 = sadd.s32 %s493, %s494
      %s496 = smul.addr %s495, 8
      %s497 = scalar_lea.vmem %s11, %s496
      %s498 = smul.u32 8, %s27
      %p499 = scmp.lt.s32.totalorder %s26, 1
      %s500 = scalar_select %p499, %s26, 1
      %p501 = scmp.lt.s32.totalorder %s498, 31
      %s502 = scalar_select %p501, %s498, 31
      %s503 = smul.addr %s500, 32
      %s504 = sadd.s32 %s502, %s503
      %s505 = smul.addr %s504, 8
      %s506 = scalar_lea.vmem %s0, %s505
      %s507 = smul.u32 8, %s27
      %s508 = smul.u32 %s27, 4
      %s509 = ssub.s32 %s508, 1
      %p510 = scmp.gt.s32.totalorder %s509, 0
      %s511 = scalar_select %p510, %s509, 0
      %s512 = smul.u32 2, %s511
      %p513 = scmp.lt.s32.totalorder %s26, 1
      %s514 = scalar_select %p513, %s26, 1
      %p515 = scmp.lt.s32.totalorder %s512, 31
      %s516 = scalar_select %p515, %s512, 31
      %s517 = smul.addr %s514, 32
      %s518 = sadd.s32 %s516, %s517
      %s519 = smul.addr %s518, 8
      %s520 = scalar_lea.vmem %s1, %s519
      %s521 = smul.u32 %s27, 4
      %s522 = ssub.s32 %s521, 1
      %p523 = scmp.gt.s32.totalorder %s522, 0
      %s524 = scalar_select %p523, %s522, 0
      %s525 = smul.u32 2, %s524
      %s526 = smul.u32 %s27, 4
      %s527 = sadd.s32 %s526, 4
      %p528 = scmp.lt.s32.totalorder %s527, 15
      %s529 = scalar_select %p528, %s527, 15
      %s530 = smul.u32 2, %s529
      %p531 = scmp.lt.s32.totalorder %s26, 1
      %s532 = scalar_select %p531, %s26, 1
      %p533 = scmp.lt.s32.totalorder %s530, 31
      %s534 = scalar_select %p533, %s530, 31
      %s535 = smul.addr %s532, 32
      %s536 = sadd.s32 %s534, %s535
      %s537 = smul.addr %s536, 8
      %s538 = scalar_lea.vmem %s2, %s537
      %s539 = smul.u32 %s27, 4
      %s540 = sadd.s32 %s539, 4
      %p541 = scmp.lt.s32.totalorder %s540, 15
      %s542 = scalar_select %p541, %s540, 15
      %s543 = smul.u32 2, %s542
      %s544 = smul.u32 8, %s27
      %p545 = scmp.lt.s32.totalorder %s26, 1
      %s546 = scalar_select %p545, %s26, 1
      %p547 = scmp.lt.s32.totalorder %s544, 31
      %s548 = scalar_select %p547, %s544, 31
      %s549 = smul.addr %s546, 32
      %s550 = sadd.s32 %s548, %s549
      %s551 = smul.addr %s550, 8
      %s552 = scalar_lea.vmem %s11, %s551
      %s553 = smul.u32 8, %s27
      %v554 = vld [vmem:[%s506] sm:$0xff]
      %v555 = vld [vmem:[%s506 + $0x8] sm:$0xff]
      %v556 = vld [vmem:[%s506 + $0x10] sm:$0xff]
      %v557 = vld [vmem:[%s506 + $0x18] sm:$0xff]
      %v558 = vld [vmem:[%s506 + $0x20] sm:$0xff]
      %v559 = vld [vmem:[%s506 + $0x28] sm:$0xff]
      %v560 = vld [vmem:[%s506 + $0x30] sm:$0xff]
      %v561 = vld [vmem:[%s506 + $0x38] sm:$0xff]
      %v562 = vld [vmem:[%s5] sm:$0xff]
      %v563 = vld [vmem:[%s5 + $0x8] sm:$0xff]
      %v564 = vld [vmem:[%s6] sm:$0x1]
      %v566 = vlaneseq
      %v567 = vshrl.u32 %v566, 7
      %v568 = vsub.s32 0, %v567
      %v569 = vrot.slane %v564, %v568
      %vm571 = vcmask 130048
      %v573 = vsel %vm571, %v554, 0
      %v576 = vsel %vm571, %v555, 0
      %v579 = vsel %vm571, %v556, 0
      %v582 = vsel %vm571, %v557, 0
      %v585 = vsel %vm571, %v558, 0
      %v588 = vsel %vm571, %v559, 0
      %v591 = vsel %vm571, %v560, 0
      %v594 = vsel %vm571, %v561, 0
      %596 = vmatprep.subr.mxu0 0.0
      %597 = vmatpush1.msra.mxu0 %v562
      %598 = vmatprep.subr.mxu0 0.0
      %599 = vmatpush1.msra.mxu0 %v563
      %600 = vmatprep.subr.mxu0 0.0
      %601 = vmatpush1.msra.mxu0 0.0
      %602 = vmatprep.subr.mxu0 0.0
      %603 = vmatpush1.msra.mxu0 0.0
      %604 = vmatprep.subr.mxu0 0.0
      %605 = vmatpush1.msra.mxu0 0.0
      %606 = vmatprep.subr.mxu0 0.0
      %607 = vmatpush1.msra.mxu0 0.0
      %608 = vmatprep.subr.mxu0 0.0
      %609 = vmatpush1.msra.mxu0 0.0
      %610 = vmatprep.subr.mxu0 0.0
      %611 = vmatpush1.msra.mxu0 0.0
      %612 = vmatprep.subr.mxu0 0.0
      %613 = vmatpush1.msra.mxu0 0.0
      %614 = vmatprep.subr.mxu0 0.0
      %615 = vmatpush1.msra.mxu0 0.0
      %616 = vmatprep.subr.mxu0 0.0
      %617 = vmatpush1.msra.mxu0 0.0
      %618 = vmatprep.subr.mxu0 0.0
      %619 = vmatpush1.msra.mxu0 0.0
      %620 = vmatprep.subr.mxu0 0.0
      %621 = vmatpush1.msra.mxu0 0.0
      %622 = vmatprep.subr.mxu0 0.0
      %623 = vmatpush1.msra.mxu0 0.0
      %624 = vmatprep.subr.mxu0 0.0
      %625 = vmatpush1.msra.mxu0 0.0
      %626 = vmatprep.subr.mxu0 0.0
      %627 = vmatpush1.msra.mxu0 0.0
      %628 = vmatprep.subr.mxu0 0.0
      %629 = vmatpush1.msra.mxu0 0.0
      %630 = vmatprep.subr.mxu0 0.0
      %631 = vmatpush1.msra.mxu0 0.0
      %632 = vmatprep.subr.mxu0 0.0
      %633 = vmatpush1.msra.mxu0 0.0
      %634 = vmatprep.subr.mxu0 0.0
      %635 = vmatpush1.msra.mxu0 0.0
      %636 = vmatprep.subr.mxu0 0.0
      %637 = vmatpush1.msra.mxu0 0.0
      %638 = vmatprep.subr.mxu0 0.0
      %639 = vmatpush1.msra.mxu0 0.0
      %640 = vmatprep.subr.mxu0 0.0
      %641 = vmatpush1.msra.mxu0 0.0
      %642 = vmatprep.subr.mxu0 0.0
      %643 = vmatpush1.msra.mxu0 0.0
      %644 = vmatprep.subr.mxu0 0.0
      %645 = vmatpush1.msra.mxu0 0.0
      %646 = vmatprep.subr.mxu0 0.0
      %647 = vmatpush1.msra.mxu0 0.0
      %648 = vmatprep.subr.mxu0 0.0
      %649 = vmatpush1.msra.mxu0 0.0
      %650 = vmatprep.subr.mxu0 0.0
      %651 = vmatpush1.msra.mxu0 0.0
      %652 = vmatprep.subr.mxu0 0.0
      %653 = vmatpush1.msra.mxu0 0.0
      %654 = vmatprep.subr.mxu0 0.0
      %655 = vmatpush1.msra.mxu0 0.0
      %656 = vmatprep.subr.mxu0 0.0
      %657 = vmatpush1.msra.mxu0 0.0
      %658 = vmatprep.subr.mxu0 0.0
      %659 = vmatpush1.msra.mxu0 0.0
      %660 = vmatprep.mubr.f32.mxu0 0.0
      %661 = vmatmul.mubr.f32.gmra.mrb[0].mxu0 %v573
      %v662 = vpop.f32.mrb[0].mxu0
      %v663 = vadd.f32 %v569, %v662
      %v664 = vpop.f32.mrb[0].mxu0
      %665 = vmatprep.mubr.f32.mxu0 0.0
      %666 = vmatmul.mubr.f32.gmra.mrb[0].mxu0 %v576
      %v667 = vpop.f32.mrb[0].mxu0
      %v668 = vadd.f32 %v569, %v667
      %v669 = vpop.f32.mrb[0].mxu0
      %670 = vmatprep.mubr.f32.mxu0 0.0
      %671 = vmatmul.mubr.f32.gmra.mrb[0].mxu0 %v579
      %v672 = vpop.f32.mrb[0].mxu0
      %v673 = vadd.f32 %v569, %v672
      %v674 = vpop.f32.mrb[0].mxu0
      %675 = vmatprep.mubr.f32.mxu0 0.0
      %676 = vmatmul.mubr.f32.gmra.mrb[0].mxu0 %v582
      %v677 = vpop.f32.mrb[0].mxu0
      %v678 = vadd.f32 %v569, %v677
      %v679 = vpop.f32.mrb[0].mxu0
      %680 = vmatprep.mubr.f32.mxu0 0.0
      %681 = vmatmul.mubr.f32.gmra.mrb[0].mxu0 %v585
      %v682 = vpop.f32.mrb[0].mxu0
      %v683 = vadd.f32 %v569, %v682
      %v684 = vpop.f32.mrb[0].mxu0
      %685 = vmatprep.mubr.f32.mxu0 0.0
      %686 = vmatmul.mubr.f32.gmra.mrb[0].mxu0 %v588
      %v687 = vpop.f32.mrb[0].mxu0
      %v688 = vadd.f32 %v569, %v687
      %v689 = vpop.f32.mrb[0].mxu0
      %690 = vmatprep.mubr.f32.mxu0 0.0
      %691 = vmatmul.mubr.f32.gmra.mrb[0].mxu0 %v591
      %v692 = vpop.f32.mrb[0].mxu0
      %v693 = vadd.f32 %v569, %v692
      %v694 = vpop.f32.mrb[0].mxu0
      %695 = vmatprep.mubr.f32.mxu0 0.0
      %696 = vmatmul.mubr.f32.gmra.mrb[0].mxu0 %v594
      %v697 = vpop.f32.mrb[0].mxu0
      %v698 = vadd.f32 %v569, %v697
      %v699 = vpop.f32.mrb[0].mxu0
      %700 = vdwg.mxu0
      %v701 = vmax.f32 %v663, 0.0
      %v702 = vmax.f32 %v668, 0.0
      %v703 = vmax.f32 %v673, 0.0
      %v704 = vmax.f32 %v678, 0.0
      %v705 = vmax.f32 %v683, 0.0
      %v706 = vmax.f32 %v688, 0.0
      %v707 = vmax.f32 %v693, 0.0
      %v708 = vmax.f32 %v698, 0.0
      %v709 = vld [vmem:[%s520] sm:$0xff]
      %v710 = vld [vmem:[%s520 + $0x8] sm:$0xff]
      %v712 = vsel %vm571, %v709, 0
      %v715 = vsel %vm571, %v710, 0
      %717 = vmatprep.subr.mxu0 0.0
      %718 = vmatpush1.msra.mxu0 %v562
      %719 = vmatprep.subr.mxu0 0.0
      %720 = vmatpush1.msra.mxu0 %v563
      %721 = vmatprep.subr.mxu0 0.0
      %722 = vmatpush1.msra.mxu0 0.0
      %723 = vmatprep.subr.mxu0 0.0
      %724 = vmatpush1.msra.mxu0 0.0
      %725 = vmatprep.subr.mxu0 0.0
      %726 = vmatpush1.msra.mxu0 0.0
      %727 = vmatprep.subr.mxu0 0.0
      %728 = vmatpush1.msra.mxu0 0.0
      %729 = vmatprep.subr.mxu0 0.0
      %730 = vmatpush1.msra.mxu0 0.0
      %731 = vmatprep.subr.mxu0 0.0
      %732 = vmatpush1.msra.mxu0 0.0
      %733 = vmatprep.subr.mxu0 0.0
      %734 = vmatpush1.msra.mxu0 0.0
      %735 = vmatprep.subr.mxu0 0.0
      %736 = vmatpush1.msra.mxu0 0.0
      %737 = vmatprep.subr.mxu0 0.0
      %738 = vmatpush1.msra.mxu0 0.0
      %739 = vmatprep.subr.mxu0 0.0
      %740 = vmatpush1.msra.mxu0 0.0
      %741 = vmatprep.subr.mxu0 0.0
      %742 = vmatpush1.msra.mxu0 0.0
      %743 = vmatprep.subr.mxu0 0.0
      %744 = vmatpush1.msra.mxu0 0.0
      %745 = vmatprep.subr.mxu0 0.0
      %746 = vmatpush1.msra.mxu0 0.0
      %747 = vmatprep.subr.mxu0 0.0
      %748 = vmatpush1.msra.mxu0 0.0
      %749 = vmatprep.subr.mxu0 0.0
      %750 = vmatpush1.msra.mxu0 0.0
      %751 = vmatprep.subr.mxu0 0.0
      %752 = vmatpush1.msra.mxu0 0.0
      %753 = vmatprep.subr.mxu0 0.0
      %754 = vmatpush1.msra.mxu0 0.0
      %755 = vmatprep.subr.mxu0 0.0
      %756 = vmatpush1.msra.mxu0 0.0
      %757 = vmatprep.subr.mxu0 0.0
      %758 = vmatpush1.msra.mxu0 0.0
      %759 = vmatprep.subr.mxu0 0.0
      %760 = vmatpush1.msra.mxu0 0.0
      %761 = vmatprep.subr.mxu0 0.0
      %762 = vmatpush1.msra.mxu0 0.0
      %763 = vmatprep.subr.mxu0 0.0
      %764 = vmatpush1.msra.mxu0 0.0
      %765 = vmatprep.subr.mxu0 0.0
      %766 = vmatpush1.msra.mxu0 0.0
      %767 = vmatprep.subr.mxu0 0.0
      %768 = vmatpush1.msra.mxu0 0.0
      %769 = vmatprep.subr.mxu0 0.0
      %770 = vmatpush1.msra.mxu0 0.0
      %771 = vmatprep.subr.mxu0 0.0
      %772 = vmatpush1.msra.mxu0 0.0
      %773 = vmatprep.subr.mxu0 0.0
      %774 = vmatpush1.msra.mxu0 0.0
      %775 = vmatprep.subr.mxu0 0.0
      %776 = vmatpush1.msra.mxu0 0.0
      %777 = vmatprep.subr.mxu0 0.0
      %778 = vmatpush1.msra.mxu0 0.0
      %779 = vmatprep.subr.mxu0 0.0
      %780 = vmatpush1.msra.mxu0 0.0
      %781 = vmatprep.mubr.f32.mxu0 0.0
      %782 = vmatmul.mubr.f32.gmra.mrb[0].mxu0 %v712
      %v783 = vpop.f32.mrb[0].mxu0
      %v784 = vadd.f32 %v569, %v783
      %v785 = vpop.f32.mrb[0].mxu0
      %786 = vmatprep.mubr.f32.mxu0 0.0
      %787 = vmatmul.mubr.f32.gmra.mrb[0].mxu0 %v715
      %v788 = vpop.f32.mrb[0].mxu0
      %v789 = vadd.f32 %v569, %v788
      %v790 = vpop.f32.mrb[0].mxu0
      %791 = vdwg.mxu0
      %v792 = vmax.f32 %v784, 0.0
      %v793 = vmax.f32 %v789, 0.0
      %p794 = scmp.gt.s32.totalorder %s27, 0
      %s795 = scalar_select %p794, 1, 0
      %s796 = scvt.s32.f32 %s795
      %v797 = vstv %s796
      %v798 = vmul.f32 %v792, %v797
      %v799 = vmul.f32 %v793, %v797
      %v800 = vld [vmem:[%s538] sm:$0xff]
      %v801 = vld [vmem:[%s538 + $0x8] sm:$0xff]
      %v803 = vsel %vm571, %v800, 0
      %v806 = vsel %vm571, %v801, 0
      %808 = vmatprep.subr.mxu0 0.0
      %809 = vmatpush1.msra.mxu0 %v562
      %810 = vmatprep.subr.mxu0 0.0
      %811 = vmatpush1.msra.mxu0 %v563
      %812 = vmatprep.subr.mxu0 0.0
      %813 = vmatpush1.msra.mxu0 0.0
      %814 = vmatprep.subr.mxu0 0.0
      %815 = vmatpush1.msra.mxu0 0.0
      %816 = vmatprep.subr.mxu0 0.0
      %817 = vmatpush1.msra.mxu0 0.0
      %818 = vmatprep.subr.mxu0 0.0
      %819 = vmatpush1.msra.mxu0 0.0
      %820 = vmatprep.subr.mxu0 0.0
      %821 = vmatpush1.msra.mxu0 0.0
      %822 = vmatprep.subr.mxu0 0.0
      %823 = vmatpush1.msra.mxu0 0.0
      %824 = vmatprep.subr.mxu0 0.0
      %825 = vmatpush1.msra.mxu0 0.0
      %826 = vmatprep.subr.mxu0 0.0
      %827 = vmatpush1.msra.mxu0 0.0
      %828 = vmatprep.subr.mxu0 0.0
      %829 = vmatpush1.msra.mxu0 0.0
      %830 = vmatprep.subr.mxu0 0.0
      %831 = vmatpush1.msra.mxu0 0.0
      %832 = vmatprep.subr.mxu0 0.0
      %833 = vmatpush1.msra.mxu0 0.0
      %834 = vmatprep.subr.mxu0 0.0
      %835 = vmatpush1.msra.mxu0 0.0
      %836 = vmatprep.subr.mxu0 0.0
      %837 = vmatpush1.msra.mxu0 0.0
      %838 = vmatprep.subr.mxu0 0.0
      %839 = vmatpush1.msra.mxu0 0.0
      %840 = vmatprep.subr.mxu0 0.0
      %841 = vmatpush1.msra.mxu0 0.0
      %842 = vmatprep.subr.mxu0 0.0
      %843 = vmatpush1.msra.mxu0 0.0
      %844 = vmatprep.subr.mxu0 0.0
      %845 = vmatpush1.msra.mxu0 0.0
      %846 = vmatprep.subr.mxu0 0.0
      %847 = vmatpush1.msra.mxu0 0.0
      %848 = vmatprep.subr.mxu0 0.0
      %849 = vmatpush1.msra.mxu0 0.0
      %850 = vmatprep.subr.mxu0 0.0
      %851 = vmatpush1.msra.mxu0 0.0
      %852 = vmatprep.subr.mxu0 0.0
      %853 = vmatpush1.msra.mxu0 0.0
      %854 = vmatprep.subr.mxu0 0.0
      %855 = vmatpush1.msra.mxu0 0.0
      %856 = vmatprep.subr.mxu0 0.0
      %857 = vmatpush1.msra.mxu0 0.0
      %858 = vmatprep.subr.mxu0 0.0
      %859 = vmatpush1.msra.mxu0 0.0
      %860 = vmatprep.subr.mxu0 0.0
      %861 = vmatpush1.msra.mxu0 0.0
      %862 = vmatprep.subr.mxu0 0.0
      %863 = vmatpush1.msra.mxu0 0.0
      %864 = vmatprep.subr.mxu0 0.0
      %865 = vmatpush1.msra.mxu0 0.0
      %866 = vmatprep.subr.mxu0 0.0
      %867 = vmatpush1.msra.mxu0 0.0
      %868 = vmatprep.subr.mxu0 0.0
      %869 = vmatpush1.msra.mxu0 0.0
      %870 = vmatprep.subr.mxu0 0.0
      %871 = vmatpush1.msra.mxu0 0.0
      %872 = vmatprep.mubr.f32.mxu0 0.0
      %873 = vmatmul.mubr.f32.gmra.mrb[0].mxu0 %v803
      %v874 = vpop.f32.mrb[0].mxu0
      %v875 = vadd.f32 %v569, %v874
      %v876 = vpop.f32.mrb[0].mxu0
      %877 = vmatprep.mubr.f32.mxu0 0.0
      %878 = vmatmul.mubr.f32.gmra.mrb[0].mxu0 %v806
      %v879 = vpop.f32.mrb[0].mxu0
      %v880 = vadd.f32 %v569, %v879
      %v881 = vpop.f32.mrb[0].mxu0
      %882 = vdwg.mxu0
      %v883 = vmax.f32 %v875, 0.0
      %v884 = vmax.f32 %v880, 0.0
      %p885 = scmp.lt.s32.totalorder %s27, 3
      %s886 = scalar_select %p885, 1, 0
      %s887 = scvt.s32.f32 %s886
      %v888 = vstv %s887
      %v889 = vmul.f32 %v883, %v888
      %v890 = vmul.f32 %v884, %v888
      %v891 = vrot.slane %v798, 7
      %v892 = vrot.slane %v799, 7
      %v893 = vrot.slane %v701, 7
      %v894 = vrot.slane %v702, 7
      %v895 = vrot.slane %v703, 7
      %v896 = vrot.slane %v704, 7
      %v897 = vrot.slane %v705, 7
      %v898 = vrot.slane %v706, 7
      %v899 = vrot.slane %v707, 7
      %v900 = vrot.slane %v708, 7
      %v901 = vrot.slane %v889, 7
      %v902 = vrot.slane %v890, 7
      %v903 = vlaneseq
      %v904 = vshrl.u32 %v903, 7
      %vm905 = vcmp.lt.s32.totalorder %v904, 1
      %v906 = vsel %vm905, %v901, %v902
      %v907 = vsel %vm905, %v900, %v901
      %v908 = vsel %vm905, %v899, %v900
      %v909 = vsel %vm905, %v898, %v899
      %v910 = vsel %vm905, %v897, %v898
      %v911 = vsel %vm905, %v896, %v897
      %v912 = vsel %vm905, %v895, %v896
      %v913 = vsel %vm905, %v894, %v895
      %v914 = vsel %vm905, %v893, %v894
      %v915 = vsel %vm905, %v892, %v893
      %v916 = vsel %vm905, %v891, %v892
      %v917 = vsel %vm905, %v902, %v891
      %v918 = vld [vmem:[%s3] sm:$0xff]
      %v919 = vld [vmem:[%s3 + $0x8] sm:$0xff]
      %v920 = vld [vmem:[%s3 + $0x10] sm:$0xff]
      %v921 = vld [vmem:[%s3 + $0x18] sm:$0xff]
      %v922 = vld [vmem:[%s3 + $0x20] sm:$0xff]
      %v923 = vld [vmem:[%s3 + $0x28] sm:$0xff]
      %v924 = vld [vmem:[%s3 + $0x30] sm:$0xff]
      %v925 = vld [vmem:[%s3 + $0x38] sm:$0xff]
      %v926 = vld [vmem:[%s3 + $0x40] sm:$0xff]
      %v927 = vld [vmem:[%s3 + $0x48] sm:$0xff]
      %v928 = vld [vmem:[%s3 + $0x50] sm:$0xff]
      %v929 = vld [vmem:[%s3 + $0x58] sm:$0xff]
      %931 = vset.pattern.permute.xlu0 0
      %932 = vperm.xlu0 %931, %v918
      %v933 = vpop.permute.xlu0 %932
      %936 = vset.pattern.permute.xlu0 0
      %937 = vperm.xlu0 %936, %v919
      %v938 = vpop.permute.xlu0 %937
      %941 = vset.pattern.permute.xlu0 0
      %942 = vperm.xlu0 %941, %v920
      %v943 = vpop.permute.xlu0 %942
      %946 = vset.pattern.permute.xlu0 0
      %947 = vperm.xlu0 %946, %v921
      %v948 = vpop.permute.xlu0 %947
      %951 = vset.pattern.permute.xlu0 0
      %952 = vperm.xlu0 %951, %v922
      %v953 = vpop.permute.xlu0 %952
      %956 = vset.pattern.permute.xlu0 0
      %957 = vperm.xlu0 %956, %v923
      %v958 = vpop.permute.xlu0 %957
      %961 = vset.pattern.permute.xlu0 0
      %962 = vperm.xlu0 %961, %v924
      %v963 = vpop.permute.xlu0 %962
      %966 = vset.pattern.permute.xlu0 0
      %967 = vperm.xlu0 %966, %v925
      %v968 = vpop.permute.xlu0 %967
      %971 = vset.pattern.permute.xlu0 0
      %972 = vperm.xlu0 %971, %v926
      %v973 = vpop.permute.xlu0 %972
      %976 = vset.pattern.permute.xlu0 0
      %977 = vperm.xlu0 %976, %v927
      %v978 = vpop.permute.xlu0 %977
      %981 = vset.pattern.permute.xlu0 0
      %982 = vperm.xlu0 %981, %v928
      %v983 = vpop.permute.xlu0 %982
      %986 = vset.pattern.permute.xlu0 0
      %987 = vperm.xlu0 %986, %v929
      %v988 = vpop.permute.xlu0 %987
      %v990 = vmul.f32 %v917, %v933
      %v991 = vmul.f32 %v916, %v938
      %v992 = vmul.f32 %v915, %v943
      %v993 = vmul.f32 %v914, %v948
      %v994 = vmul.f32 %v913, %v953
      %v995 = vmul.f32 %v912, %v958
      %v996 = vmul.f32 %v911, %v963
      %v997 = vmul.f32 %v910, %v968
      %v998 = vmul.f32 %v909, %v973
      %v999 = vmul.f32 %v908, %v978
      %v1000 = vmul.f32 %v907, %v983
      %v1001 = vmul.f32 %v906, %v988
      %v1002 = vrot.slane %v798, 1
      %v1003 = vrot.slane %v799, 1
      %v1004 = vrot.slane %v701, 1
      %v1005 = vrot.slane %v702, 1
      %v1006 = vrot.slane %v703, 1
      %v1007 = vrot.slane %v704, 1
      %v1008 = vrot.slane %v705, 1
      %v1009 = vrot.slane %v706, 1
      %v1010 = vrot.slane %v707, 1
      %v1011 = vrot.slane %v708, 1
      %v1012 = vrot.slane %v889, 1
      %v1013 = vrot.slane %v890, 1
      %vm1014 = vcmp.lt.s32.totalorder %v904, 7
      %v1015 = vsel %vm1014, %v1012, %v1013
      %v1016 = vsel %vm1014, %v1011, %v1012
      %v1017 = vsel %vm1014, %v1010, %v1011
      %v1018 = vsel %vm1014, %v1009, %v1010
      %v1019 = vsel %vm1014, %v1008, %v1009
      %v1020 = vsel %vm1014, %v1007, %v1008
      %v1021 = vsel %vm1014, %v1006, %v1007
      %v1022 = vsel %vm1014, %v1005, %v1006
      %v1023 = vsel %vm1014, %v1004, %v1005
      %v1024 = vsel %vm1014, %v1003, %v1004
      %v1025 = vsel %vm1014, %v1002, %v1003
      %v1026 = vsel %vm1014, %v1013, %v1002
      %v1027 = vld [vmem:[%s4] sm:$0xff]
      %v1028 = vld [vmem:[%s4 + $0x8] sm:$0xff]
      %v1029 = vld [vmem:[%s4 + $0x10] sm:$0xff]
      %v1030 = vld [vmem:[%s4 + $0x18] sm:$0xff]
      %v1031 = vld [vmem:[%s4 + $0x20] sm:$0xff]
      %v1032 = vld [vmem:[%s4 + $0x28] sm:$0xff]
      %v1033 = vld [vmem:[%s4 + $0x30] sm:$0xff]
      %v1034 = vld [vmem:[%s4 + $0x38] sm:$0xff]
      %v1035 = vld [vmem:[%s4 + $0x40] sm:$0xff]
      %v1036 = vld [vmem:[%s4 + $0x48] sm:$0xff]
      %v1037 = vld [vmem:[%s4 + $0x50] sm:$0xff]
      %v1038 = vld [vmem:[%s4 + $0x58] sm:$0xff]
      %1040 = vset.pattern.permute.xlu0 0
      %1041 = vperm.xlu0 %1040, %v1027
      %v1042 = vpop.permute.xlu0 %1041
      %1045 = vset.pattern.permute.xlu0 0
      %1046 = vperm.xlu0 %1045, %v1028
      %v1047 = vpop.permute.xlu0 %1046
      %1050 = vset.pattern.permute.xlu0 0
      %1051 = vperm.xlu0 %1050, %v1029
      %v1052 = vpop.permute.xlu0 %1051
      %1055 = vset.pattern.permute.xlu0 0
      %1056 = vperm.xlu0 %1055, %v1030
      %v1057 = vpop.permute.xlu0 %1056
      %1060 = vset.pattern.permute.xlu0 0
      %1061 = vperm.xlu0 %1060, %v1031
      %v1062 = vpop.permute.xlu0 %1061
      %1065 = vset.pattern.permute.xlu0 0
      %1066 = vperm.xlu0 %1065, %v1032
      %v1067 = vpop.permute.xlu0 %1066
      %1070 = vset.pattern.permute.xlu0 0
      %1071 = vperm.xlu0 %1070, %v1033
      %v1072 = vpop.permute.xlu0 %1071
      %1075 = vset.pattern.permute.xlu0 0
      %1076 = vperm.xlu0 %1075, %v1034
      %v1077 = vpop.permute.xlu0 %1076
      %1080 = vset.pattern.permute.xlu0 0
      %1081 = vperm.xlu0 %1080, %v1035
      %v1082 = vpop.permute.xlu0 %1081
      %1085 = vset.pattern.permute.xlu0 0
      %1086 = vperm.xlu0 %1085, %v1036
      %v1087 = vpop.permute.xlu0 %1086
      %1090 = vset.pattern.permute.xlu0 0
      %1091 = vperm.xlu0 %1090, %v1037
      %v1092 = vpop.permute.xlu0 %1091
      %1095 = vset.pattern.permute.xlu0 0
      %1096 = vperm.xlu0 %1095, %v1038
      %v1097 = vpop.permute.xlu0 %1096
      %v1099 = vmul.f32 %v1025, %v1042
      %v1100 = vmul.f32 %v1024, %v1047
      %v1101 = vmul.f32 %v1023, %v1052
      %v1102 = vmul.f32 %v1022, %v1057
      %v1103 = vmul.f32 %v1021, %v1062
      %v1104 = vmul.f32 %v1020, %v1067
      %v1105 = vmul.f32 %v1019, %v1072
      %v1106 = vmul.f32 %v1018, %v1077
      %v1107 = vmul.f32 %v1017, %v1082
      %v1108 = vmul.f32 %v1016, %v1087
      %v1109 = vmul.f32 %v1015, %v1092
      %v1110 = vmul.f32 %v1026, %v1097
      %1123 = vrot.lane.b32.xlu0 %v798, 4
      %v1124 = vpop.permute.xlu0 %1123
      %1125 = vrot.lane.b32.xlu0 %v799, 4
      %v1126 = vpop.permute.xlu0 %1125
      %1127 = vrot.lane.b32.xlu0 %v701, 4
      %v1128 = vpop.permute.xlu0 %1127
      %1129 = vrot.lane.b32.xlu0 %v702, 4
      %v1130 = vpop.permute.xlu0 %1129
      %1131 = vrot.lane.b32.xlu0 %v703, 4
      %v1132 = vpop.permute.xlu0 %1131
      %1133 = vrot.lane.b32.xlu0 %v704, 4
      %v1134 = vpop.permute.xlu0 %1133
      %1135 = vrot.lane.b32.xlu0 %v705, 4
      %v1136 = vpop.permute.xlu0 %1135
      %1137 = vrot.lane.b32.xlu0 %v706, 4
      %v1138 = vpop.permute.xlu0 %1137
      %1139 = vrot.lane.b32.xlu0 %v707, 4
      %v1140 = vpop.permute.xlu0 %1139
      %1141 = vrot.lane.b32.xlu0 %v708, 4
      %v1142 = vpop.permute.xlu0 %1141
      %1143 = vrot.lane.b32.xlu0 %v889, 4
      %v1144 = vpop.permute.xlu0 %1143
      %1145 = vrot.lane.b32.xlu0 %v890, 4
      %v1146 = vpop.permute.xlu0 %1145
      %1171 = vrot.lane.b32.xlu0 %v1099, 8
      %v1172 = vpop.permute.xlu0 %1171
      %1173 = vrot.lane.b32.xlu0 %v1100, 8
      %v1174 = vpop.permute.xlu0 %1173
      %1175 = vrot.lane.b32.xlu0 %v1101, 8
      %v1176 = vpop.permute.xlu0 %1175
      %1177 = vrot.lane.b32.xlu0 %v1102, 8
      %v1178 = vpop.permute.xlu0 %1177
      %1179 = vrot.lane.b32.xlu0 %v1103, 8
      %v1180 = vpop.permute.xlu0 %1179
      %1181 = vrot.lane.b32.xlu0 %v1104, 8
      %v1182 = vpop.permute.xlu0 %1181
      %1183 = vrot.lane.b32.xlu0 %v1105, 8
      %v1184 = vpop.permute.xlu0 %1183
      %1185 = vrot.lane.b32.xlu0 %v1106, 8
      %v1186 = vpop.permute.xlu0 %1185
      %1187 = vrot.lane.b32.xlu0 %v1107, 8
      %v1188 = vpop.permute.xlu0 %1187
      %1189 = vrot.lane.b32.xlu0 %v1108, 8
      %v1190 = vpop.permute.xlu0 %1189
      %1191 = vrot.lane.b32.xlu0 %v1109, 8
      %v1192 = vpop.permute.xlu0 %1191
      %1193 = vrot.lane.b32.xlu0 %v1110, 8
      %v1194 = vpop.permute.xlu0 %1193
      %vm1207 = vcmask 31744
      %v1208 = vsel %vm1207, %v990, %v1124
      %v1209 = vsel %vm1207, %v991, %v1126
      %v1210 = vsel %vm1207, %v992, %v1128
      %v1211 = vsel %vm1207, %v993, %v1130
      %v1212 = vsel %vm1207, %v994, %v1132
      %v1213 = vsel %vm1207, %v995, %v1134
      %v1214 = vsel %vm1207, %v996, %v1136
      %v1215 = vsel %vm1207, %v997, %v1138
      %v1216 = vsel %vm1207, %v998, %v1140
      %v1217 = vsel %vm1207, %v999, %v1142
      %v1218 = vsel %vm1207, %v1000, %v1144
      %v1219 = vsel %vm1207, %v1001, %v1146
      %vm1220 = vcmask 64512
      %v1221 = vsel %vm1220, %v1208, %v1172
      %v1222 = vsel %vm1220, %v1209, %v1174
      %v1223 = vsel %vm1220, %v1210, %v1176
      %v1224 = vsel %vm1220, %v1211, %v1178
      %v1225 = vsel %vm1220, %v1212, %v1180
      %v1226 = vsel %vm1220, %v1213, %v1182
      %v1227 = vsel %vm1220, %v1214, %v1184
      %v1228 = vsel %vm1220, %v1215, %v1186
      %v1229 = vsel %vm1220, %v1216, %v1188
      %v1230 = vsel %vm1220, %v1217, %v1190
      %v1231 = vsel %vm1220, %v1218, %v1192
      %v1232 = vsel %vm1220, %v1219, %v1194
      %1241 = vrot.lane.b32.xlu0 %v1223, 12
      %v1242 = vpop.permute.xlu0 %1241
      %1243 = vrot.lane.b32.xlu0 %v1224, 12
      %v1244 = vpop.permute.xlu0 %1243
      %1245 = vrot.lane.b32.xlu0 %v1225, 12
      %v1246 = vpop.permute.xlu0 %1245
      %1247 = vrot.lane.b32.xlu0 %v1226, 12
      %v1248 = vpop.permute.xlu0 %1247
      %1249 = vrot.lane.b32.xlu0 %v1227, 12
      %v1250 = vpop.permute.xlu0 %1249
      %1251 = vrot.lane.b32.xlu0 %v1228, 12
      %v1252 = vpop.permute.xlu0 %1251
      %1253 = vrot.lane.b32.xlu0 %v1229, 12
      %v1254 = vpop.permute.xlu0 %1253
      %1255 = vrot.lane.b32.xlu0 %v1230, 12
      %v1256 = vpop.permute.xlu0 %1255
      %1267 = vrot.lane.b32.xlu0 %v1225, 24
      %v1268 = vpop.permute.xlu0 %1267
      %1269 = vrot.lane.b32.xlu0 %v1226, 24
      %v1270 = vpop.permute.xlu0 %1269
      %1271 = vrot.lane.b32.xlu0 %v1227, 24
      %v1272 = vpop.permute.xlu0 %1271
      %1273 = vrot.lane.b32.xlu0 %v1228, 24
      %v1274 = vpop.permute.xlu0 %1273
      %1275 = vrot.lane.b32.xlu0 %v1229, 24
      %v1276 = vpop.permute.xlu0 %1275
      %1277 = vrot.lane.b32.xlu0 %v1230, 24
      %v1278 = vpop.permute.xlu0 %1277
      %1279 = vrot.lane.b32.xlu0 %v1231, 24
      %v1280 = vpop.permute.xlu0 %1279
      %1281 = vrot.lane.b32.xlu0 %v1232, 24
      %v1282 = vpop.permute.xlu0 %1281
      %vm1291 = vcmask 97280
      %v1292 = vsel %vm1291, %v1221, %v1242
      %v1293 = vsel %vm1291, %v1222, %v1244
      %v1294 = vsel %vm1291, %v1223, %v1246
      %v1295 = vsel %vm1291, %v1224, %v1248
      %v1296 = vsel %vm1291, %v1225, %v1250
      %v1297 = vsel %vm1291, %v1226, %v1252
      %v1298 = vsel %vm1291, %v1227, %v1254
      %v1299 = vsel %vm1291, %v1228, %v1256
      %vm1300 = vcmask 195584
      %v1301 = vsel %vm1300, %v1292, %v1268
      %v1302 = vsel %vm1300, %v1293, %v1270
      %v1303 = vsel %vm1300, %v1294, %v1272
      %v1304 = vsel %vm1300, %v1295, %v1274
      %v1305 = vsel %vm1300, %v1296, %v1276
      %v1306 = vsel %vm1300, %v1297, %v1278
      %v1307 = vsel %vm1300, %v1298, %v1280
      %v1308 = vsel %vm1300, %v1299, %v1282
      %v1309 = vld [vmem:[%s7] sm:$0xff]
      %v1310 = vld [vmem:[%s7 + $0x8] sm:$0xff]
      %v1311 = vld [vmem:[%s7 + $0x10] sm:$0xff]
      %v1312 = vld [vmem:[%s7 + $0x18] sm:$0xff]
      %v1313 = vld [vmem:[%s7 + $0x20] sm:$0xf]
      %v1314 = vld [vmem:[%s8] sm:$0x1]
      %v1316 = vlaneseq
      %v1317 = vshrl.u32 %v1316, 7
      %v1318 = vsub.s32 0, %v1317
      %v1319 = vrot.slane %v1314, %v1318
      %vm1321 = vcmask 293888
      %v1323 = vsel %vm1321, %v1301, 0
      %v1326 = vsel %vm1321, %v1302, 0
      %v1329 = vsel %vm1321, %v1303, 0
      %v1332 = vsel %vm1321, %v1304, 0
      %v1335 = vsel %vm1321, %v1305, 0
      %v1338 = vsel %vm1321, %v1306, 0
      %v1341 = vsel %vm1321, %v1307, 0
      %v1344 = vsel %vm1321, %v1308, 0
      %vm1346 = vcmask 1043456
      %v1348 = vsel %vm1346, %v1313, 0
      %1350 = vmatprep.subr.mxu0 0.0
      %1351 = vmatpush1.msra.mxu0 %v1309
      %1352 = vmatprep.subr.mxu0 0.0
      %1353 = vmatpush1.msra.mxu0 %v1310
      %1354 = vmatprep.subr.mxu0 0.0
      %1355 = vmatpush1.msra.mxu0 %v1311
      %1356 = vmatprep.subr.mxu0 0.0
      %1357 = vmatpush1.msra.mxu0 %v1312
      %1358 = vmatprep.subr.mxu0 0.0
      %1359 = vmatpush1.msra.mxu0 %v1348
      %1360 = vmatprep.subr.mxu0 0.0
      %1361 = vmatpush1.msra.mxu0 0.0
      %1362 = vmatprep.subr.mxu0 0.0
      %1363 = vmatpush1.msra.mxu0 0.0
      %1364 = vmatprep.subr.mxu0 0.0
      %1365 = vmatpush1.msra.mxu0 0.0
      %1366 = vmatprep.subr.mxu0 0.0
      %1367 = vmatpush1.msra.mxu0 0.0
      %1368 = vmatprep.subr.mxu0 0.0
      %1369 = vmatpush1.msra.mxu0 0.0
      %1370 = vmatprep.subr.mxu0 0.0
      %1371 = vmatpush1.msra.mxu0 0.0
      %1372 = vmatprep.subr.mxu0 0.0
      %1373 = vmatpush1.msra.mxu0 0.0
      %1374 = vmatprep.subr.mxu0 0.0
      %1375 = vmatpush1.msra.mxu0 0.0
      %1376 = vmatprep.subr.mxu0 0.0
      %1377 = vmatpush1.msra.mxu0 0.0
      %1378 = vmatprep.subr.mxu0 0.0
      %1379 = vmatpush1.msra.mxu0 0.0
      %1380 = vmatprep.subr.mxu0 0.0
      %1381 = vmatpush1.msra.mxu0 0.0
      %1382 = vmatprep.subr.mxu0 0.0
      %1383 = vmatpush1.msra.mxu0 0.0
      %1384 = vmatprep.subr.mxu0 0.0
      %1385 = vmatpush1.msra.mxu0 0.0
      %1386 = vmatprep.subr.mxu0 0.0
      %1387 = vmatpush1.msra.mxu0 0.0
      %1388 = vmatprep.subr.mxu0 0.0
      %1389 = vmatpush1.msra.mxu0 0.0
      %1390 = vmatprep.subr.mxu0 0.0
      %1391 = vmatpush1.msra.mxu0 0.0
      %1392 = vmatprep.subr.mxu0 0.0
      %1393 = vmatpush1.msra.mxu0 0.0
      %1394 = vmatprep.subr.mxu0 0.0
      %1395 = vmatpush1.msra.mxu0 0.0
      %1396 = vmatprep.subr.mxu0 0.0
      %1397 = vmatpush1.msra.mxu0 0.0
      %1398 = vmatprep.subr.mxu0 0.0
      %1399 = vmatpush1.msra.mxu0 0.0
      %1400 = vmatprep.subr.mxu0 0.0
      %1401 = vmatpush1.msra.mxu0 0.0
      %1402 = vmatprep.subr.mxu0 0.0
      %1403 = vmatpush1.msra.mxu0 0.0
      %1404 = vmatprep.subr.mxu0 0.0
      %1405 = vmatpush1.msra.mxu0 0.0
      %1406 = vmatprep.subr.mxu0 0.0
      %1407 = vmatpush1.msra.mxu0 0.0
      %1408 = vmatprep.subr.mxu0 0.0
      %1409 = vmatpush1.msra.mxu0 0.0
      %1410 = vmatprep.subr.mxu0 0.0
      %1411 = vmatpush1.msra.mxu0 0.0
      %1412 = vmatprep.subr.mxu0 0.0
      %1413 = vmatpush1.msra.mxu0 0.0
      %1414 = vmatprep.mubr.f32.mxu0 0.0
      %1415 = vmatmul.mubr.f32.gmra.mrb[0].mxu0 %v1323
      %v1416 = vpop.f32.mrb[0].mxu0
      %v1417 = vadd.f32 %v1319, %v1416
      %v1418 = vpop.f32.mrb[0].mxu0
      %1419 = vmatprep.mubr.f32.mxu0 0.0
      %1420 = vmatmul.mubr.f32.gmra.mrb[0].mxu0 %v1326
      %v1421 = vpop.f32.mrb[0].mxu0
      %v1422 = vadd.f32 %v1319, %v1421
      %v1423 = vpop.f32.mrb[0].mxu0
      %1424 = vmatprep.mubr.f32.mxu0 0.0
      %1425 = vmatmul.mubr.f32.gmra.mrb[0].mxu0 %v1329
      %v1426 = vpop.f32.mrb[0].mxu0
      %v1427 = vadd.f32 %v1319, %v1426
      %v1428 = vpop.f32.mrb[0].mxu0
      %1429 = vmatprep.mubr.f32.mxu0 0.0
      %1430 = vmatmul.mubr.f32.gmra.mrb[0].mxu0 %v1332
      %v1431 = vpop.f32.mrb[0].mxu0
      %v1432 = vadd.f32 %v1319, %v1431
      %v1433 = vpop.f32.mrb[0].mxu0
      %1434 = vmatprep.mubr.f32.mxu0 0.0
      %1435 = vmatmul.mubr.f32.gmra.mrb[0].mxu0 %v1335
      %v1436 = vpop.f32.mrb[0].mxu0
      %v1437 = vadd.f32 %v1319, %v1436
      %v1438 = vpop.f32.mrb[0].mxu0
      %1439 = vmatprep.mubr.f32.mxu0 0.0
      %1440 = vmatmul.mubr.f32.gmra.mrb[0].mxu0 %v1338
      %v1441 = vpop.f32.mrb[0].mxu0
      %v1442 = vadd.f32 %v1319, %v1441
      %v1443 = vpop.f32.mrb[0].mxu0
      %1444 = vmatprep.mubr.f32.mxu0 0.0
      %1445 = vmatmul.mubr.f32.gmra.mrb[0].mxu0 %v1341
      %v1446 = vpop.f32.mrb[0].mxu0
      %v1447 = vadd.f32 %v1319, %v1446
      %v1448 = vpop.f32.mrb[0].mxu0
      %1449 = vmatprep.mubr.f32.mxu0 0.0
      %1450 = vmatmul.mubr.f32.gmra.mrb[0].mxu0 %v1344
      %v1451 = vpop.f32.mrb[0].mxu0
      %v1452 = vadd.f32 %v1319, %v1451
      %v1453 = vpop.f32.mrb[0].mxu0
      %1454 = vdwg.mxu0
      %v1455 = vmax.f32 %v1417, 0.0
      %v1456 = vmax.f32 %v1422, 0.0
      %v1457 = vmax.f32 %v1427, 0.0
      %v1458 = vmax.f32 %v1432, 0.0
      %v1459 = vmax.f32 %v1437, 0.0
      %v1460 = vmax.f32 %v1442, 0.0
      %v1461 = vmax.f32 %v1447, 0.0
      %v1462 = vmax.f32 %v1452, 0.0
      %v1463 = vld [vmem:[%s9] sm:$0xf]
      %v1464 = vld [vmem:[%s10] sm:$0x1]
      %v1466 = vlaneseq
      %v1467 = vshrl.u32 %v1466, 7
      %v1468 = vsub.s32 0, %v1467
      %v1469 = vrot.slane %v1464, %v1468
      %v1472 = vsel %vm1207, %v1455, 0
      %v1475 = vsel %vm1207, %v1456, 0
      %v1478 = vsel %vm1207, %v1457, 0
      %v1481 = vsel %vm1207, %v1458, 0
      %v1484 = vsel %vm1207, %v1459, 0
      %v1487 = vsel %vm1207, %v1460, 0
      %v1490 = vsel %vm1207, %v1461, 0
      %v1493 = vsel %vm1207, %v1462, 0
      %v1496 = vsel %vm1346, %v1463, 0
      %1498 = vmatprep.subr.mxu0 0.0
      %1499 = vmatpush1.msra.mxu0 %v1496
      %1500 = vmatprep.subr.mxu0 0.0
      %1501 = vmatpush1.msra.mxu0 0.0
      %1502 = vmatprep.subr.mxu0 0.0
      %1503 = vmatpush1.msra.mxu0 0.0
      %1504 = vmatprep.subr.mxu0 0.0
      %1505 = vmatpush1.msra.mxu0 0.0
      %1506 = vmatprep.subr.mxu0 0.0
      %1507 = vmatpush1.msra.mxu0 0.0
      %1508 = vmatprep.subr.mxu0 0.0
      %1509 = vmatpush1.msra.mxu0 0.0
      %1510 = vmatprep.subr.mxu0 0.0
      %1511 = vmatpush1.msra.mxu0 0.0
      %1512 = vmatprep.subr.mxu0 0.0
      %1513 = vmatpush1.msra.mxu0 0.0
      %1514 = vmatprep.subr.mxu0 0.0
      %1515 = vmatpush1.msra.mxu0 0.0
      %1516 = vmatprep.subr.mxu0 0.0
      %1517 = vmatpush1.msra.mxu0 0.0
      %1518 = vmatprep.subr.mxu0 0.0
      %1519 = vmatpush1.msra.mxu0 0.0
      %1520 = vmatprep.subr.mxu0 0.0
      %1521 = vmatpush1.msra.mxu0 0.0
      %1522 = vmatprep.subr.mxu0 0.0
      %1523 = vmatpush1.msra.mxu0 0.0
      %1524 = vmatprep.subr.mxu0 0.0
      %1525 = vmatpush1.msra.mxu0 0.0
      %1526 = vmatprep.subr.mxu0 0.0
      %1527 = vmatpush1.msra.mxu0 0.0
      %1528 = vmatprep.subr.mxu0 0.0
      %1529 = vmatpush1.msra.mxu0 0.0
      %1530 = vmatprep.subr.mxu0 0.0
      %1531 = vmatpush1.msra.mxu0 0.0
      %1532 = vmatprep.subr.mxu0 0.0
      %1533 = vmatpush1.msra.mxu0 0.0
      %1534 = vmatprep.subr.mxu0 0.0
      %1535 = vmatpush1.msra.mxu0 0.0
      %1536 = vmatprep.subr.mxu0 0.0
      %1537 = vmatpush1.msra.mxu0 0.0
      %1538 = vmatprep.subr.mxu0 0.0
      %1539 = vmatpush1.msra.mxu0 0.0
      %1540 = vmatprep.subr.mxu0 0.0
      %1541 = vmatpush1.msra.mxu0 0.0
      %1542 = vmatprep.subr.mxu0 0.0
      %1543 = vmatpush1.msra.mxu0 0.0
      %1544 = vmatprep.subr.mxu0 0.0
      %1545 = vmatpush1.msra.mxu0 0.0
      %1546 = vmatprep.subr.mxu0 0.0
      %1547 = vmatpush1.msra.mxu0 0.0
      %1548 = vmatprep.subr.mxu0 0.0
      %1549 = vmatpush1.msra.mxu0 0.0
      %1550 = vmatprep.subr.mxu0 0.0
      %1551 = vmatpush1.msra.mxu0 0.0
      %1552 = vmatprep.subr.mxu0 0.0
      %1553 = vmatpush1.msra.mxu0 0.0
      %1554 = vmatprep.subr.mxu0 0.0
      %1555 = vmatpush1.msra.mxu0 0.0
      %1556 = vmatprep.subr.mxu0 0.0
      %1557 = vmatpush1.msra.mxu0 0.0
      %1558 = vmatprep.subr.mxu0 0.0
      %1559 = vmatpush1.msra.mxu0 0.0
      %1560 = vmatprep.subr.mxu0 0.0
      %1561 = vmatpush1.msra.mxu0 0.0
      %1562 = vmatprep.mubr.f32.mxu0 0.0
      %1563 = vmatmul.mubr.f32.gmra.mrb[0].mxu0 %v1472
      %v1564 = vpop.f32.mrb[0].mxu0
      %v1565 = vadd.f32 %v1469, %v1564
      %v1566 = vpop.f32.mrb[0].mxu0
      %1567 = vmatprep.mubr.f32.mxu0 0.0
      %1568 = vmatmul.mubr.f32.gmra.mrb[0].mxu0 %v1475
      %v1569 = vpop.f32.mrb[0].mxu0
      %v1570 = vadd.f32 %v1469, %v1569
      %v1571 = vpop.f32.mrb[0].mxu0
      %1572 = vmatprep.mubr.f32.mxu0 0.0
      %1573 = vmatmul.mubr.f32.gmra.mrb[0].mxu0 %v1478
      %v1574 = vpop.f32.mrb[0].mxu0
      %v1575 = vadd.f32 %v1469, %v1574
      %v1576 = vpop.f32.mrb[0].mxu0
      %1577 = vmatprep.mubr.f32.mxu0 0.0
      %1578 = vmatmul.mubr.f32.gmra.mrb[0].mxu0 %v1481
      %v1579 = vpop.f32.mrb[0].mxu0
      %v1580 = vadd.f32 %v1469, %v1579
      %v1581 = vpop.f32.mrb[0].mxu0
      %1582 = vmatprep.mubr.f32.mxu0 0.0
      %1583 = vmatmul.mubr.f32.gmra.mrb[0].mxu0 %v1484
      %v1584 = vpop.f32.mrb[0].mxu0
      %v1585 = vadd.f32 %v1469, %v1584
      %v1586 = vpop.f32.mrb[0].mxu0
      %1587 = vmatprep.mubr.f32.mxu0 0.0
      %1588 = vmatmul.mubr.f32.gmra.mrb[0].mxu0 %v1487
      %v1589 = vpop.f32.mrb[0].mxu0
      %v1590 = vadd.f32 %v1469, %v1589
      %v1591 = vpop.f32.mrb[0].mxu0
      %1592 = vmatprep.mubr.f32.mxu0 0.0
      %1593 = vmatmul.mubr.f32.gmra.mrb[0].mxu0 %v1490
      %v1594 = vpop.f32.mrb[0].mxu0
      %v1595 = vadd.f32 %v1469, %v1594
      %v1596 = vpop.f32.mrb[0].mxu0
      %1597 = vmatprep.mubr.f32.mxu0 0.0
      %1598 = vmatmul.mubr.f32.gmra.mrb[0].mxu0 %v1493
      %v1599 = vpop.f32.mrb[0].mxu0
      %v1600 = vadd.f32 %v1469, %v1599
      %v1601 = vpop.f32.mrb[0].mxu0
      %1602 = vdwg.mxu0
      %v1603 = vadd.f32 %v1565, %v554
      %v1604 = vadd.f32 %v1570, %v555
      %v1605 = vadd.f32 %v1575, %v556
      %v1606 = vadd.f32 %v1580, %v557
      %v1607 = vadd.f32 %v1585, %v558
      %v1608 = vadd.f32 %v1590, %v559
      %v1609 = vadd.f32 %v1595, %v560
      %v1610 = vadd.f32 %v1600, %v561
      %v1611 = vmax.f32 %v1603, 0.0
      %v1612 = vmax.f32 %v1604, 0.0
      %v1613 = vmax.f32 %v1605, 0.0
      %v1614 = vmax.f32 %v1606, 0.0
      %v1615 = vmax.f32 %v1607, 0.0
      %v1616 = vmax.f32 %v1608, 0.0
      %v1617 = vmax.f32 %v1609, 0.0
      %v1618 = vmax.f32 %v1610, 0.0
      %1619 = vst.msk [vmem:[%s552] sm:$0xff] %vm571, %v1611
      %1620 = vst.msk [vmem:[%s552 + $0x8] sm:$0xff] %vm571, %v1612
      %1621 = vst.msk [vmem:[%s552 + $0x10] sm:$0xff] %vm571, %v1613
      %1622 = vst.msk [vmem:[%s552 + $0x18] sm:$0xff] %vm571, %v1614
      %1623 = vst.msk [vmem:[%s552 + $0x20] sm:$0xff] %vm571, %v1615
      %1624 = vst.msk [vmem:[%s552 + $0x28] sm:$0xff] %vm571, %v1616
      %1625 = vst.msk [vmem:[%s552 + $0x30] sm:$0xff] %vm571, %v1617
      %1626 = vst.msk [vmem:[%s552 + $0x38] sm:$0xff] %vm571, %v1618
      %s1627 = smul.u32 8, %s27
      %p1628 = scmp.lt.s32.totalorder %s26, 1
      %s1629 = scalar_select %p1628, %s26, 1
      %p1630 = scmp.lt.s32.totalorder %s1627, 31
      %s1631 = scalar_select %p1630, %s1627, 31
      %s1632 = smul.addr %s1629, 32
      %s1633 = sadd.s32 %s1631, %s1632
      %s1634 = smul.addr %s1633, 8
      %s1635 = scalar_lea.vmem %s11, %s1634
      // Predicated region
      $region65: #{tpu_custom_call.1} parent=63 // pred_check
        %p1636 = pneg %p322
      $region66: #{tpu_custom_call.1} parent=63 // pred_check_branch
        %1638 = sbr.rel (%p1636) target = $region68
      $region67: #{tpu_custom_call.1} parent=63 // pred_region
        %s1639 = smul.u32 8, %s27
      $region68: #{tpu_custom_call.1} parent=63 // pred_fallthru
        _
    $region64: #{tpu_custom_call.1} parent=5 // pred_fallthru
      _
    %p1640 = scmp.le.s32.totalorder 2, %s17
    // Predicated region
    $region69: #{tpu_custom_call.1} parent=5 // pred_check
      %p1641 = pneg %p1640
    $region70: #{tpu_custom_call.1} parent=5 // pred_check_branch
      %1643 = sbr.rel (%p1641) target = $region72
    $region71: #{tpu_custom_call.1} parent=5 // pred_region
      %s1644 = ssub.s32 %s17, 2
      // Predicated region
      $region73: #{tpu_custom_call.1} parent=71 // pred_check
        %p1645 = pneg %p328
      $region74: #{tpu_custom_call.1} parent=71 // pred_check_branch
        %1647 = sbr.rel (%p1645) target = $region76
      $region75: #{tpu_custom_call.1} parent=71 // pred_region
        %s1648 = smul.u32 8, %s29
        %p1649 = scmp.lt.s32.totalorder %s28, 1
        %s1650 = scalar_select %p1649, %s28, 1
        %p1651 = scmp.lt.s32.totalorder %s1648, 31
        %s1652 = scalar_select %p1651, %s1648, 31
        %s1653 = smul.addr %s1650, 32
        %s1654 = sadd.s32 %s1652, %s1653
        %s1655 = smul.addr %s1654, 8
        %s1656 = scalar_lea.vmem %s11, %s1655
      $region76: #{tpu_custom_call.1} parent=71 // pred_fallthru
        _
    $region72: #{tpu_custom_call.1} parent=5 // pred_fallthru
      _
  $region6: #{tpu_custom_call.1} parent=0 // loop_footer
    %s21 = sadd.s32 1, %s17
  $region7: #{tpu_custom_call.1} parent=0 // loop_footer_branch
    %16 = sbr.rel target = $region3
  $region8: #{tpu_custom_call.1} parent=0 // loop_exit
    _

</llo_original>
